<compile_context>
chip_gen: v7x
topology: tpu7x:2x2x1
jax: 0.10.0
libtpu: 0.0.40
codegen_flags: <defaults>
</compile_context>

<pallas_src>
import math
from functools import partial

import jax
import jax.numpy as jnp
from jax.experimental import pallas as pl
from jax.experimental.pallas import tpu as pltpu


# ------------------------------ fused kernel ------------------------------

def fused_transformer_kernel(x_ref, pe_ref,
                             wqkv_ref, bqkv_ref, wo_ref, bo_ref,
                             ln1w_ref, ln1b_ref,
                             w1_ref, b1_ref, w2_ref, b2_ref,
                             ln2w_ref, ln2b_ref,
                             wd_ref, bd_ref,
                             o_ref, x_sc,
                             *, BB, S, H, Dh):
    """Grid = (batch_blocks, n_layers).  Processes one batch block through one layer.
    Activation (BB*S, D) lives in VMEM scratch across the layer axis; all L layers' weights
    are VMEM-resident (full-L blocks, constant index_map) and selected with [l]."""
    D = H * Dh
    T = BB * S
    l = pl.program_id(1)
    L = pl.num_programs(1)
    cdt = jnp.bfloat16  # MXU operand dtype (fp32 accumulation)

    # ---- layer 0: load input block + add positional encoding (broadcast over batch) ----
    @pl.when(l == 0)
    def _():
        x0 = x_ref[...].reshape(BB, S, D) + pe_ref[...]          # (BB,S,D) + (S,D)
        x_sc[...] = x0.reshape(T, D)

    x = x_sc[...]                                                # (T, D) fp32
    xb = x.astype(cdt)

    # ---- self-attention: fused QKV projection ----
    # wqkv columns are head-major:  col = h*(3*Dh) + {q,k,v}*Dh + dh
    # (1/sqrt(Dh) already folded into the q columns / q bias in the wrapper)
    qkv = jnp.dot(xb, wqkv_ref[l], preferred_element_type=jnp.float32) + bqkv_ref[l]

    # head split: one (3*Dh)-wide slice per head, single axis-0 concat -> (H*BB, S, 3*Dh)
    qkv_h = jnp.concatenate(
        [qkv[:, h * 3 * Dh:(h + 1) * 3 * Dh].reshape(BB, S, 3 * Dh) for h in range(H)],
        axis=0)
    qh = qkv_h[:, :, 0:Dh].astype(cdt)
    kh = qkv_h[:, :, Dh:2 * Dh].astype(cdt)
    vh = qkv_h[:, :, 2 * Dh:3 * Dh].astype(cdt)

    # batched attention (single leading batch dim g = h*BB + b)
    s = jnp.einsum('gqd,gkd->gqk', qh, kh,
                   preferred_element_type=jnp.float32)           # (H*BB, S, S) fp32
    s = s - jnp.max(s, axis=-1, keepdims=True)
    p = jnp.exp(s)
    p = p * pl.reciprocal(jnp.sum(p, axis=-1, keepdims=True), approx=True)
    ctx = jnp.einsum('gqk,gkd->gqd', p.astype(cdt), vh,
                     preferred_element_type=jnp.float32)         # (H*BB, S, Dh)

    # back to token-major (T, D): leading-dim slices + one lane concat (head-major columns)
    ctx2 = jnp.concatenate(
        [ctx[h * BB:(h + 1) * BB].reshape(T, Dh) for h in range(H)], axis=-1)

    attn = jnp.dot(ctx2.astype(cdt), wo_ref[l],
                   preferred_element_type=jnp.float32) + bo_ref[l]

    # ---- residual + LayerNorm1 (eps=1e-5, biased variance, fp32) ----
    x1 = x + attn
    mu1 = jnp.mean(x1, axis=-1, keepdims=True)
    c1 = x1 - mu1
    v1 = jnp.mean(c1 * c1, axis=-1, keepdims=True)
    x1n = c1 * jax.lax.rsqrt(v1 + 1e-5) * ln1w_ref[l] + ln1b_ref[l]

    # ---- feed-forward (ReLU) ----
    h1 = jnp.dot(x1n.astype(cdt), w1_ref[l],
                 preferred_element_type=jnp.float32) + b1_ref[l]
    h1 = jnp.maximum(h1, 0.0)
    ff = jnp.dot(h1.astype(cdt), w2_ref[l],
                 preferred_element_type=jnp.float32) + b2_ref[l]

    # ---- residual + LayerNorm2 ----
    x2 = x1n + ff
    mu2 = jnp.mean(x2, axis=-1, keepdims=True)
    c2 = x2 - mu2
    v2 = jnp.mean(c2 * c2, axis=-1, keepdims=True)
    x2n = c2 * jax.lax.rsqrt(v2 + 1e-5) * ln2w_ref[l] + ln2b_ref[l]

    x_sc[...] = x2n

    # ---- last layer: mean over sequence -> decoder -> sigmoid (lane-dense padded output) ----
    @pl.when(l == L - 1)
    def _():
        m = jnp.mean(x2n.reshape(BB, S, D), axis=1)              # (BB, D)
        logits = jnp.dot(m.astype(cdt), wd_ref[...],
                         preferred_element_type=jnp.float32) + bd_ref[...]
        o_ref[...] = jax.nn.sigmoid(logits)


# ----------------------------- wrapper / glue ------------------------------

def make_positional_encoding(seq_len, d_model):
    # Matches the module as specified (separate sin/cos denominators).
    pos = jnp.arange(seq_len, dtype=jnp.float32)[:, None]
    sin_den = 10000.0 ** (jnp.arange(0, d_model, 2, dtype=jnp.float32) / d_model)
    cos_den = 10000.0 ** (jnp.arange(1, d_model, 2, dtype=jnp.float32) / d_model)
    pe = jnp.zeros((seq_len, d_model), dtype=jnp.float32)
    pe = pe.at[:, 0::2].set(jnp.sin(pos / sin_den))
    pe = pe.at[:, 1::2].set(jnp.cos(pos / cos_den))
    return pe


def init_params(key, trg_vocab_size, d_model, n_head, dim_feedforward, n_layers, lane=128):
    """fp32 master parameters (standard layout); kernel operands are derived in the wrapper."""
    D, FF, L = d_model, dim_feedforward, n_layers
    Vp = ((trg_vocab_size + lane - 1) // lane) * lane            # lane-dense decoder width
    scale = 0.05
    ks = jax.random.split(key, 5)
    params = {
        # per-layer weights stacked along a leading L axis, pre-transposed (in_dim, out_dim)
        "wqkv": scale * jax.random.normal(ks[0], (L, D, 3 * D), jnp.float32),
        "bqkv": jnp.zeros((L, 1, 3 * D), jnp.float32),
        "wo":   scale * jax.random.normal(ks[1], (L, D, D), jnp.float32),
        "bo":   jnp.zeros((L, 1, D), jnp.float32),
        "ln1w": jnp.ones((L, 1, D), jnp.float32),
        "ln1b": jnp.zeros((L, 1, D), jnp.float32),
        "w1":   scale * jax.random.normal(ks[2], (L, D, FF), jnp.float32),
        "b1":   jnp.zeros((L, 1, FF), jnp.float32),
        "w2":   scale * jax.random.normal(ks[3], (L, FF, D), jnp.float32),
        "b2":   jnp.zeros((L, 1, D), jnp.float32),
        "ln2w": jnp.ones((L, 1, D), jnp.float32),
        "ln2b": jnp.zeros((L, 1, D), jnp.float32),
    }
    wd = scale * jax.random.normal(ks[4], (D, trg_vocab_size), jnp.float32)
    params["wd"] = jnp.zeros((D, Vp), jnp.float32).at[:, :trg_vocab_size].set(wd)
    params["bd"] = jnp.zeros((1, Vp), jnp.float32)
    params["n_out"] = trg_vocab_size
    return params


def _prep_kernel_weights(params, n_head):
    """fp32 masters -> kernel operands:
       * wqkv/bqkv columns permuted head-major (h, {q,k,v}, dh),
       * 1/sqrt(Dh) folded into the q columns / q bias,
       * matmul weights cast to bf16 ONCE (fp32 accumulation in-kernel)."""
    L, D, _ = params["wqkv"].shape
    H = n_head
    Dh = D // H
    inv_sqrt = 1.0 / math.sqrt(Dh)
    qkv_scale = jnp.array([inv_sqrt, 1.0, 1.0], jnp.float32).reshape(1, 1, 3, 1, 1)

    w = params["wqkv"].reshape(L, D, 3, H, Dh) * qkv_scale
    b = params["bqkv"].reshape(L, 1, 3, H, Dh) * qkv_scale
    wqkv = jnp.transpose(w, (0, 1, 3, 2, 4)).reshape(L, D, 3 * D)    # head-major columns
    bqkv = jnp.transpose(b, (0, 1, 3, 2, 4)).reshape(L, 1, 3 * D)

    wdt = jnp.bfloat16
    return dict(
        wqkv=wqkv.astype(wdt), bqkv=bqkv,
        wo=params["wo"].astype(wdt), bo=params["bo"],
        ln1w=params["ln1w"], ln1b=params["ln1b"],
        w1=params["w1"].astype(wdt), b1=params["b1"],
        w2=params["w2"].astype(wdt), b2=params["b2"],
        ln2w=params["ln2w"], ln2b=params["ln2b"],
        wd=params["wd"].astype(wdt), bd=params["bd"],
    )


def _live_bytes(BB, S, D, FF, H):
    """Rough per-step live fp32 footprint (activation temporaries + S^2 softmax term)."""
    T = BB * S
    return 4 * (9 * T * D + 2 * H * BB * S * S + T * FF)


def _choose_batch_block(B, S, D, FF, H, live_budget=40 * 1024 * 1024):
    """Pick BB: fit the (conservative, v7x-safe) VMEM live budget, target BB*S >= 256 MXU
    rows, prefer >= 2 batch blocks (v7x dual-TC) and BB % 8 == 0 (unmasked output store)."""
    divisors = [d for d in range(1, B + 1) if B % d == 0]
    aligned = [d for d in divisors if d % 8 == 0 or d == B]
    for pool in (aligned, divisors):
        cand = [d for d in pool if _live_bytes(d, S, D, FF, H) <= live_budget]
        if not cand:
            continue
        best = [d for d in cand if d * S >= 256 and B // d >= 2]
        if best:
            return min(best)
        best = [d for d in cand if d * S >= 256]
        if best:
            return min(best)
        return max(cand)
    return 1


def transformer_classifier_forward(x_sbd, params, *, n_head, batch_block=None):
    """x_sbd: (S, B, D), seq-major like PyTorch (batch_first=False)."""
    S, B, D = x_sbd.shape
    H = n_head
    Dh = D // H
    L = params["wqkv"].shape[0]
    FF = params["w1"].shape[2]
    Vp = params["wd"].shape[1]
    V = params["n_out"]

    BB = _choose_batch_block(B, S, D, FF, H) if batch_block is None else batch_block
    assert B % BB == 0
    nb = B // BB

    # explicit scoped-VMEM limit: live activations + resident weights (+ headroom), clamped
    weight_bytes = 2 * L * (3 * D * D + D * D + 2 * D * FF) + 2 * D * Vp \
        + 4 * L * (9 * D + FF) + 4 * Vp
    est = _live_bytes(BB, S, D, FF, H) + weight_bytes + 8 * (BB * S * D + BB * Vp)
    vmem_limit = int(max(32 * 1024 * 1024, min(64 * 1024 * 1024, 2 * est)))

    # glue: transpose to batch-major and flatten -> (B*S, D); row index = b*S + s
    x = jnp.transpose(x_sbd, (1, 0, 2)).reshape(B * S, D).astype(jnp.float32)
    pe = make_positional_encoding(S, D)                          # (S, D), passed once
    kw = _prep_kernel_weights(params, n_head)

    wfull = lambda b, l: (0, 0, 0)    # all-layer weight blocks, resident (fetched once)
    cmap = lambda b, l: (0, 0)        # grid-invariant (PE, decoder)

    out = pl.pallas_call(
        partial(fused_transformer_kernel, BB=BB, S=S, H=H, Dh=Dh),
        out_shape=jax.ShapeDtypeStruct((B, Vp), jnp.float32),
        grid=(nb, L),
        in_specs=[
            pl.BlockSpec((BB * S, D), lambda b, l: (b, 0)),      # x (read at l==0)
            pl.BlockSpec((S, D), cmap),                          # positional encoding
            pl.BlockSpec((L, D, 3 * D), wfull),                  # wqkv (all layers resident)
            pl.BlockSpec((L, 1, 3 * D), wfull),                  # bqkv
            pl.BlockSpec((L, D, D), wfull),                      # wo
            pl.BlockSpec((L, 1, D), wfull),                      # bo
            pl.BlockSpec((L, 1, D), wfull),                      # ln1w
            pl.BlockSpec((L, 1, D), wfull),                      # ln1b
            pl.BlockSpec((L, D, FF), wfull),                     # w1
            pl.BlockSpec((L, 1, FF), wfull),                     # b1
            pl.BlockSpec((L, FF, D), wfull),                     # w2
            pl.BlockSpec((L, 1, D), wfull),                      # b2
            pl.BlockSpec((L, 1, D), wfull),                      # ln2w
            pl.BlockSpec((L, 1, D), wfull),                      # ln2b
            pl.BlockSpec((D, Vp), cmap),                         # decoder weight (lane-padded)
            pl.BlockSpec((1, Vp), cmap),                         # decoder bias
        ],
        out_specs=pl.BlockSpec((BB, Vp), lambda b, l: (b, 0)),
        scratch_shapes=[pltpu.VMEM((BB * S, D), jnp.float32)],   # resident activation
        compiler_params=pltpu.CompilerParams(
            dimension_semantics=("parallel", "arbitrary"),
            vmem_limit_bytes=vmem_limit),
    )(x, pe,
      kw["wqkv"], kw["bqkv"], kw["wo"], kw["bo"],
      kw["ln1w"], kw["ln1b"],
      kw["w1"], kw["b1"], kw["w2"], kw["b2"],
      kw["ln2w"], kw["ln2b"],
      kw["wd"], kw["bd"])

    return out[:, :V]                                            # drop lane padding (glue)


# --------------------------------- main ------------------------------------

if __name__ == "__main__":
    trg_vocab_size = 10
    d_model = 32
    n_head = 4
    dim_feedforward = 64
    n_layers = 2
    # dropout = 0.1 -> identity at inference

    S, B = 8, 2            # sequence length, batch

    key = jax.random.PRNGKey(0)
    kx, kp = jax.random.split(key)
    x = jax.random.normal(kx, (S, B, d_model), jnp.float32)      # (seq, batch, d_model)

    params = init_params(kp, trg_vocab_size, d_model, n_head, dim_feedforward, n_layers)

    out = transformer_classifier_forward(x, params, n_head=n_head)
    out = jax.block_until_ready(out)

    assert out.shape == (B, trg_vocab_size)
    assert bool(jnp.all(jnp.isfinite(out)))
    assert bool(jnp.all((out >= 0.0) & (out <= 1.0)))
    print("KERNEL_OK")
</pallas_src>

<mosaic_0001>
module attributes {stable_mosaic.version = 11 : i64} {
  func.func @fused_transformer_kernel(%arg0: i32, %arg1: i32, %arg2: memref<16x32xf32, #tpu.memory_space<vmem>>, %arg3: memref<8x32xf32, #tpu.memory_space<vmem>>, %arg4: memref<2x32x96xbf16, #tpu.memory_space<vmem>>, %arg5: memref<2x1x96xf32, #tpu.memory_space<vmem>>, %arg6: memref<2x32x32xbf16, #tpu.memory_space<vmem>>, %arg7: memref<2x1x32xf32, #tpu.memory_space<vmem>>, %arg8: memref<2x1x32xf32, #tpu.memory_space<vmem>>, %arg9: memref<2x1x32xf32, #tpu.memory_space<vmem>>, %arg10: memref<2x32x64xbf16, #tpu.memory_space<vmem>>, %arg11: memref<2x1x64xf32, #tpu.memory_space<vmem>>, %arg12: memref<2x64x32xbf16, #tpu.memory_space<vmem>>, %arg13: memref<2x1x32xf32, #tpu.memory_space<vmem>>, %arg14: memref<2x1x32xf32, #tpu.memory_space<vmem>>, %arg15: memref<2x1x32xf32, #tpu.memory_space<vmem>>, %arg16: memref<32x128xbf16, #tpu.memory_space<vmem>>, %arg17: memref<1x128xf32, #tpu.memory_space<vmem>>, %arg18: memref<2x128xf32, #tpu.memory_space<vmem>>, %arg19: memref<16x32xf32, #tpu.memory_space<vmem>>) attributes {dimension_semantics = [#tpu.dimension_semantics<parallel>, #tpu.dimension_semantics<arbitrary>], iteration_bounds = array<i64: 1, 2>, scalar_prefetch = 0 : i64, scratch_operands = 1 : i64, tpu.core_type = #tpu.core_type<tc>, window_params = [{transform_indices = @transform_0, window_bounds = array<i64: 16, 32>}, {pipeline_mode = #tpu.pipeline_mode<synchronous>, transform_indices = @transform_1, window_bounds = array<i64: 8, 32>}, {pipeline_mode = #tpu.pipeline_mode<synchronous>, transform_indices = @transform_2, window_bounds = array<i64: 2, 32, 96>}, {pipeline_mode = #tpu.pipeline_mode<synchronous>, transform_indices = @transform_3, window_bounds = array<i64: 2, 1, 96>}, {pipeline_mode = #tpu.pipeline_mode<synchronous>, transform_indices = @transform_4, window_bounds = array<i64: 2, 32, 32>}, {pipeline_mode = #tpu.pipeline_mode<synchronous>, transform_indices = @transform_5, window_bounds = array<i64: 2, 1, 32>}, {pipeline_mode = #tpu.pipeline_mode<synchronous>, transform_indices = @transform_6, window_bounds = array<i64: 2, 1, 32>}, {pipeline_mode = #tpu.pipeline_mode<synchronous>, transform_indices = @transform_7, window_bounds = array<i64: 2, 1, 32>}, {pipeline_mode = #tpu.pipeline_mode<synchronous>, transform_indices = @transform_8, window_bounds = array<i64: 2, 32, 64>}, {pipeline_mode = #tpu.pipeline_mode<synchronous>, transform_indices = @transform_9, window_bounds = array<i64: 2, 1, 64>}, {pipeline_mode = #tpu.pipeline_mode<synchronous>, transform_indices = @transform_10, window_bounds = array<i64: 2, 64, 32>}, {pipeline_mode = #tpu.pipeline_mode<synchronous>, transform_indices = @transform_11, window_bounds = array<i64: 2, 1, 32>}, {pipeline_mode = #tpu.pipeline_mode<synchronous>, transform_indices = @transform_12, window_bounds = array<i64: 2, 1, 32>}, {pipeline_mode = #tpu.pipeline_mode<synchronous>, transform_indices = @transform_13, window_bounds = array<i64: 2, 1, 32>}, {pipeline_mode = #tpu.pipeline_mode<synchronous>, transform_indices = @transform_14, window_bounds = array<i64: 32, 128>}, {pipeline_mode = #tpu.pipeline_mode<synchronous>, transform_indices = @transform_15, window_bounds = array<i64: 1, 128>}, {transform_indices = @transform_16, window_bounds = array<i64: 2, 128>}]} {
    %c0_i32 = arith.constant 0 : i32
    %0 = arith.cmpi eq, %arg1, %c0_i32 : i32
    %1 = arith.extui %0 : i1 to i32
    %c0_i32_0 = arith.constant 0 : i32
    %2 = arith.cmpi ne, %1, %c0_i32_0 : i32
    scf.if %2 {
      %c0_47 = arith.constant 0 : index
      %c0_48 = arith.constant 0 : index
      %141 = vector.load %arg2[%c0_47, %c0_48] : memref<16x32xf32, #tpu.memory_space<vmem>>, vector<16x32xf32>
      %142 = vector.shape_cast %141 : vector<16x32xf32> to vector<2x8x32xf32>
      %c0_49 = arith.constant 0 : index
      %c0_50 = arith.constant 0 : index
      %143 = vector.load %arg3[%c0_49, %c0_50] : memref<8x32xf32, #tpu.memory_space<vmem>>, vector<8x32xf32>
      %144 = vector.shape_cast %143 : vector<8x32xf32> to vector<1x8x32xf32>
      %145 = vector.broadcast %144 : vector<1x8x32xf32> to vector<2x8x32xf32>
      %146 = arith.addf %142, %145 : vector<2x8x32xf32>
      %147 = vector.shape_cast %146 : vector<2x8x32xf32> to vector<16x32xf32>
      %c0_51 = arith.constant 0 : index
      %c0_52 = arith.constant 0 : index
      %148 = vector.load %arg19[%c0_51, %c0_52] : memref<16x32xf32, #tpu.memory_space<vmem>>, vector<16x32xf32>
      tpu.vector_store %arg19[%c0_51, %c0_52], %147 {strides = array<i32>} : memref<16x32xf32, #tpu.memory_space<vmem>>, vector<16x32xf32>,
    } else {
    }
    %c0 = arith.constant 0 : index
    %c0_1 = arith.constant 0 : index
    %3 = vector.load %arg19[%c0, %c0_1] : memref<16x32xf32, #tpu.memory_space<vmem>>, vector<16x32xf32>
    %4 = arith.truncf %3 : vector<16x32xf32> to vector<16x32xbf16>
    %5 = arith.index_cast %arg1 : i32 to index
    %c0_2 = arith.constant 0 : index
    %c0_3 = arith.constant 0 : index
    %6 = vector.load %arg4[%5, %c0_2, %c0_3] : memref<2x32x96xbf16, #tpu.memory_space<vmem>>, vector<1x32x96xbf16>
    %7 = vector.shape_cast %6 : vector<1x32x96xbf16> to vector<32x96xbf16>
    %cst = arith.constant dense<0.000000e+00> : vector<16x96xf32>
    %8 = tpu.matmul %4, %7, %cst {dimension_numbers = #tpu.dot_dimension_numbers<[1], [0], [0], [1], [0, 0, 1, 1], [], []>} : vector<16x32xbf16>, vector<32x96xbf16>, vector<16x96xf32> -> vector<16x96xf32>
    %9 = arith.index_cast %arg1 : i32 to index
    %c0_4 = arith.constant 0 : index
    %c0_5 = arith.constant 0 : index
    %10 = vector.load %arg5[%9, %c0_4, %c0_5] : memref<2x1x96xf32, #tpu.memory_space<vmem>>, vector<1x1x96xf32>
    %11 = vector.shape_cast %10 : vector<1x1x96xf32> to vector<1x96xf32>
    %12 = vector.broadcast %11 : vector<1x96xf32> to vector<16x96xf32>
    %13 = arith.addf %8, %12 : vector<16x96xf32>
    %14 = vector.extract_strided_slice %13 {offsets = [0, 0], sizes = [16, 24], strides = [1, 1]} : vector<16x96xf32> to vector<16x24xf32>
    %15 = vector.shape_cast %14 : vector<16x24xf32> to vector<2x8x24xf32>
    %16 = vector.extract_strided_slice %13 {offsets = [0, 24], sizes = [16, 24], strides = [1, 1]} : vector<16x96xf32> to vector<16x24xf32>
    %17 = vector.shape_cast %16 : vector<16x24xf32> to vector<2x8x24xf32>
    %18 = vector.extract_strided_slice %13 {offsets = [0, 48], sizes = [16, 24], strides = [1, 1]} : vector<16x96xf32> to vector<16x24xf32>
    %19 = vector.shape_cast %18 : vector<16x24xf32> to vector<2x8x24xf32>
    %20 = vector.extract_strided_slice %13 {offsets = [0, 72], sizes = [16, 24], strides = [1, 1]} : vector<16x96xf32> to vector<16x24xf32>
    %21 = vector.shape_cast %20 : vector<16x24xf32> to vector<2x8x24xf32>
    %22 = tpu.concatenate %15, %17, %19, %21 in 0 : vector<2x8x24xf32>, vector<2x8x24xf32>, vector<2x8x24xf32>, vector<2x8x24xf32> -> vector<8x8x24xf32>
    %23 = vector.extract_strided_slice %22 {offsets = [0, 0, 0], sizes = [8, 8, 8], strides = [1, 1, 1]} : vector<8x8x24xf32> to vector<8x8x8xf32>
    %24 = arith.truncf %23 : vector<8x8x8xf32> to vector<8x8x8xbf16>
    %25 = vector.extract_strided_slice %22 {offsets = [0, 0, 8], sizes = [8, 8, 8], strides = [1, 1, 1]} : vector<8x8x24xf32> to vector<8x8x8xf32>
    %26 = arith.truncf %25 : vector<8x8x8xf32> to vector<8x8x8xbf16>
    %27 = vector.extract_strided_slice %22 {offsets = [0, 0, 16], sizes = [8, 8, 8], strides = [1, 1, 1]} : vector<8x8x24xf32> to vector<8x8x8xf32>
    %28 = arith.truncf %27 : vector<8x8x8xf32> to vector<8x8x8xbf16>
    "tpu.trace_start"() <{level = 10 : i32, message = "gqd,gkd->gqk"}> : () -> ()
    %cst_6 = arith.constant dense<0.000000e+00> : vector<8x8x8xf32>
    %29 = tpu.matmul %24, %26, %cst_6 {dimension_numbers = #tpu.dot_dimension_numbers<[2], [2], [1], [1], [0, 0, 0, 1, 1, 1], [0], [0]>} : vector<8x8x8xbf16>, vector<8x8x8xbf16>, vector<8x8x8xf32> -> vector<8x8x8xf32>
    "tpu.trace_stop"() : () -> ()
    %cst_7 = arith.constant dense<0xFF800000> : vector<8x8xf32>
    %30 = vector.multi_reduction <maximumf>, %29, %cst_7 [2] : vector<8x8x8xf32> to vector<8x8xf32>
    %31 = vector.shape_cast %30 : vector<8x8xf32> to vector<8x8x1xf32>
    %32 = vector.broadcast %31 : vector<8x8x1xf32> to vector<8x8x8xf32>
    %33 = arith.subf %29, %32 : vector<8x8x8xf32>
    %34 = math.exp %33 : vector<8x8x8xf32>
    %cst_8 = arith.constant dense<0.000000e+00> : vector<8x8xf32>
    %35 = vector.multi_reduction <add>, %34, %cst_8 [2] : vector<8x8x8xf32> to vector<8x8xf32>
    %36 = vector.shape_cast %35 : vector<8x8xf32> to vector<8x8x1xf32>
    %37 = tpu.reciprocal %36 {approx = true} : vector<8x8x1xf32> -> vector<8x8x1xf32>
    %38 = vector.broadcast %37 : vector<8x8x1xf32> to vector<8x8x8xf32>
    %39 = arith.mulf %34, %38 : vector<8x8x8xf32>
    %40 = arith.truncf %39 : vector<8x8x8xf32> to vector<8x8x8xbf16>
    "tpu.trace_start"() <{level = 10 : i32, message = "gqk,gkd->gqd"}> : () -> ()
    %cst_9 = arith.constant dense<0.000000e+00> : vector<8x8x8xf32>
    %41 = tpu.matmul %40, %28, %cst_9 {dimension_numbers = #tpu.dot_dimension_numbers<[2], [1], [1], [2], [0, 0, 0, 1, 1, 2], [0], [0]>} : vector<8x8x8xbf16>, vector<8x8x8xbf16>, vector<8x8x8xf32> -> vector<8x8x8xf32>
    "tpu.trace_stop"() : () -> ()
    %42 = vector.extract_strided_slice %41 {offsets = [0, 0, 0], sizes = [2, 8, 8], strides = [1, 1, 1]} : vector<8x8x8xf32> to vector<2x8x8xf32>
    %43 = vector.shape_cast %42 : vector<2x8x8xf32> to vector<16x8xf32>
    %44 = vector.extract_strided_slice %41 {offsets = [2, 0, 0], sizes = [2, 8, 8], strides = [1, 1, 1]} : vector<8x8x8xf32> to vector<2x8x8xf32>
    %45 = vector.shape_cast %44 : vector<2x8x8xf32> to vector<16x8xf32>
    %46 = vector.extract_strided_slice %41 {offsets = [4, 0, 0], sizes = [2, 8, 8], strides = [1, 1, 1]} : vector<8x8x8xf32> to vector<2x8x8xf32>
    %47 = vector.shape_cast %46 : vector<2x8x8xf32> to vector<16x8xf32>
    %48 = vector.extract_strided_slice %41 {offsets = [6, 0, 0], sizes = [2, 8, 8], strides = [1, 1, 1]} : vector<8x8x8xf32> to vector<2x8x8xf32>
    %49 = vector.shape_cast %48 : vector<2x8x8xf32> to vector<16x8xf32>
    %50 = tpu.concatenate %43, %45, %47, %49 in 1 : vector<16x8xf32>, vector<16x8xf32>, vector<16x8xf32>, vector<16x8xf32> -> vector<16x32xf32>
    %51 = arith.truncf %50 : vector<16x32xf32> to vector<16x32xbf16>
    %52 = arith.index_cast %arg1 : i32 to index
    %c0_10 = arith.constant 0 : index
    %c0_11 = arith.constant 0 : index
    %53 = vector.load %arg6[%52, %c0_10, %c0_11] : memref<2x32x32xbf16, #tpu.memory_space<vmem>>, vector<1x32x32xbf16>
    %54 = vector.shape_cast %53 : vector<1x32x32xbf16> to vector<32x32xbf16>
    %cst_12 = arith.constant dense<0.000000e+00> : vector<16x32xf32>
    %55 = tpu.matmul %51, %54, %cst_12 {dimension_numbers = #tpu.dot_dimension_numbers<[1], [0], [0], [1], [0, 0, 1, 1], [], []>} : vector<16x32xbf16>, vector<32x32xbf16>, vector<16x32xf32> -> vector<16x32xf32>
    %56 = arith.index_cast %arg1 : i32 to index
    %c0_13 = arith.constant 0 : index
    %c0_14 = arith.constant 0 : index
    %57 = vector.load %arg7[%56, %c0_13, %c0_14] : memref<2x1x32xf32, #tpu.memory_space<vmem>>, vector<1x1x32xf32>
    %58 = vector.shape_cast %57 : vector<1x1x32xf32> to vector<1x32xf32>
    %59 = vector.broadcast %58 : vector<1x32xf32> to vector<16x32xf32>
    %60 = arith.addf %55, %59 : vector<16x32xf32>
    %61 = arith.addf %3, %60 : vector<16x32xf32>
    %cst_15 = arith.constant dense<0.000000e+00> : vector<16xf32>
    %62 = vector.multi_reduction <add>, %61, %cst_15 [1] : vector<16x32xf32> to vector<16xf32>
    %63 = vector.shape_cast %62 : vector<16xf32> to vector<16x1xf32>
    %cst_16 = arith.constant 3.200000e+01 : f32
    %64 = vector.broadcast %cst_16 : f32 to vector<16x1xf32>
    %65 = arith.divf %63, %64 : vector<16x1xf32>
    %66 = vector.broadcast %65 : vector<16x1xf32> to vector<16x32xf32>
    %67 = arith.subf %61, %66 : vector<16x32xf32>
    %68 = arith.mulf %67, %67 : vector<16x32xf32>
    %cst_17 = arith.constant dense<0.000000e+00> : vector<16xf32>
    %69 = vector.multi_reduction <add>, %68, %cst_17 [1] : vector<16x32xf32> to vector<16xf32>
    %70 = vector.shape_cast %69 : vector<16xf32> to vector<16x1xf32>
    %cst_18 = arith.constant 3.200000e+01 : f32
    %71 = vector.broadcast %cst_18 : f32 to vector<16x1xf32>
    %72 = arith.divf %70, %71 : vector<16x1xf32>
    %cst_19 = arith.constant 9.99999974E-6 : f32
    %73 = vector.broadcast %cst_19 : f32 to vector<16x1xf32>
    %74 = arith.addf %72, %73 : vector<16x1xf32>
    %75 = math.rsqrt %74 : vector<16x1xf32>
    %76 = vector.broadcast %75 : vector<16x1xf32> to vector<16x32xf32>
    %77 = arith.mulf %67, %76 : vector<16x32xf32>
    %78 = arith.index_cast %arg1 : i32 to index
    %c0_20 = arith.constant 0 : index
    %c0_21 = arith.constant 0 : index
    %79 = vector.load %arg8[%78, %c0_20, %c0_21] : memref<2x1x32xf32, #tpu.memory_space<vmem>>, vector<1x1x32xf32>
    %80 = vector.shape_cast %79 : vector<1x1x32xf32> to vector<1x32xf32>
    %81 = vector.broadcast %80 : vector<1x32xf32> to vector<16x32xf32>
    %82 = arith.mulf %77, %81 : vector<16x32xf32>
    %83 = arith.index_cast %arg1 : i32 to index
    %c0_22 = arith.constant 0 : index
    %c0_23 = arith.constant 0 : index
    %84 = vector.load %arg9[%83, %c0_22, %c0_23] : memref<2x1x32xf32, #tpu.memory_space<vmem>>, vector<1x1x32xf32>
    %85 = vector.shape_cast %84 : vector<1x1x32xf32> to vector<1x32xf32>
    %86 = vector.broadcast %85 : vector<1x32xf32> to vector<16x32xf32>
    %87 = arith.addf %82, %86 : vector<16x32xf32>
    %88 = arith.truncf %87 : vector<16x32xf32> to vector<16x32xbf16>
    %89 = arith.index_cast %arg1 : i32 to index
    %c0_24 = arith.constant 0 : index
    %c0_25 = arith.constant 0 : index
    %90 = vector.load %arg10[%89, %c0_24, %c0_25] : memref<2x32x64xbf16, #tpu.memory_space<vmem>>, vector<1x32x64xbf16>
    %91 = vector.shape_cast %90 : vector<1x32x64xbf16> to vector<32x64xbf16>
    %cst_26 = arith.constant dense<0.000000e+00> : vector<16x64xf32>
    %92 = tpu.matmul %88, %91, %cst_26 {dimension_numbers = #tpu.dot_dimension_numbers<[1], [0], [0], [1], [0, 0, 1, 1], [], []>} : vector<16x32xbf16>, vector<32x64xbf16>, vector<16x64xf32> -> vector<16x64xf32>
    %93 = arith.index_cast %arg1 : i32 to index
    %c0_27 = arith.constant 0 : index
    %c0_28 = arith.constant 0 : index
    %94 = vector.load %arg11[%93, %c0_27, %c0_28] : memref<2x1x64xf32, #tpu.memory_space<vmem>>, vector<1x1x64xf32>
    %95 = vector.shape_cast %94 : vector<1x1x64xf32> to vector<1x64xf32>
    %96 = vector.broadcast %95 : vector<1x64xf32> to vector<16x64xf32>
    %97 = arith.addf %92, %96 : vector<16x64xf32>
    %cst_29 = arith.constant 0.000000e+00 : f32
    %98 = vector.broadcast %cst_29 : f32 to vector<16x64xf32>
    %99 = arith.maximumf %97, %98 : vector<16x64xf32>
    %100 = arith.truncf %99 : vector<16x64xf32> to vector<16x64xbf16>
    %101 = arith.index_cast %arg1 : i32 to index
    %c0_30 = arith.constant 0 : index
    %c0_31 = arith.constant 0 : index
    %102 = vector.load %arg12[%101, %c0_30, %c0_31] : memref<2x64x32xbf16, #tpu.memory_space<vmem>>, vector<1x64x32xbf16>
    %103 = vector.shape_cast %102 : vector<1x64x32xbf16> to vector<64x32xbf16>
    %cst_32 = arith.constant dense<0.000000e+00> : vector<16x32xf32>
    %104 = tpu.matmul %100, %103, %cst_32 {dimension_numbers = #tpu.dot_dimension_numbers<[1], [0], [0], [1], [0, 0, 1, 1], [], []>} : vector<16x64xbf16>, vector<64x32xbf16>, vector<16x32xf32> -> vector<16x32xf32>
    %105 = arith.index_cast %arg1 : i32 to index
    %c0_33 = arith.constant 0 : index
    %c0_34 = arith.constant 0 : index
    %106 = vector.load %arg13[%105, %c0_33, %c0_34] : memref<2x1x32xf32, #tpu.memory_space<vmem>>, vector<1x1x32xf32>
    %107 = vector.shape_cast %106 : vector<1x1x32xf32> to vector<1x32xf32>
    %108 = vector.broadcast %107 : vector<1x32xf32> to vector<16x32xf32>
    %109 = arith.addf %104, %108 : vector<16x32xf32>
    %110 = arith.addf %87, %109 : vector<16x32xf32>
    %cst_35 = arith.constant dense<0.000000e+00> : vector<16xf32>
    %111 = vector.multi_reduction <add>, %110, %cst_35 [1] : vector<16x32xf32> to vector<16xf32>
    %112 = vector.shape_cast %111 : vector<16xf32> to vector<16x1xf32>
    %cst_36 = arith.constant 3.200000e+01 : f32
    %113 = vector.broadcast %cst_36 : f32 to vector<16x1xf32>
    %114 = arith.divf %112, %113 : vector<16x1xf32>
    %115 = vector.broadcast %114 : vector<16x1xf32> to vector<16x32xf32>
    %116 = arith.subf %110, %115 : vector<16x32xf32>
    %117 = arith.mulf %116, %116 : vector<16x32xf32>
    %cst_37 = arith.constant dense<0.000000e+00> : vector<16xf32>
    %118 = vector.multi_reduction <add>, %117, %cst_37 [1] : vector<16x32xf32> to vector<16xf32>
    %119 = vector.shape_cast %118 : vector<16xf32> to vector<16x1xf32>
    %cst_38 = arith.constant 3.200000e+01 : f32
    %120 = vector.broadcast %cst_38 : f32 to vector<16x1xf32>
    %121 = arith.divf %119, %120 : vector<16x1xf32>
    %cst_39 = arith.constant 9.99999974E-6 : f32
    %122 = vector.broadcast %cst_39 : f32 to vector<16x1xf32>
    %123 = arith.addf %121, %122 : vector<16x1xf32>
    %124 = math.rsqrt %123 : vector<16x1xf32>
    %125 = vector.broadcast %124 : vector<16x1xf32> to vector<16x32xf32>
    %126 = arith.mulf %116, %125 : vector<16x32xf32>
    %127 = arith.index_cast %arg1 : i32 to index
    %c0_40 = arith.constant 0 : index
    %c0_41 = arith.constant 0 : index
    %128 = vector.load %arg14[%127, %c0_40, %c0_41] : memref<2x1x32xf32, #tpu.memory_space<vmem>>, vector<1x1x32xf32>
    %129 = vector.shape_cast %128 : vector<1x1x32xf32> to vector<1x32xf32>
    %130 = vector.broadcast %129 : vector<1x32xf32> to vector<16x32xf32>
    %131 = arith.mulf %126, %130 : vector<16x32xf32>
    %132 = arith.index_cast %arg1 : i32 to index
    %c0_42 = arith.constant 0 : index
    %c0_43 = arith.constant 0 : index
    %133 = vector.load %arg15[%132, %c0_42, %c0_43] : memref<2x1x32xf32, #tpu.memory_space<vmem>>, vector<1x1x32xf32>
    %134 = vector.shape_cast %133 : vector<1x1x32xf32> to vector<1x32xf32>
    %135 = vector.broadcast %134 : vector<1x32xf32> to vector<16x32xf32>
    %136 = arith.addf %131, %135 : vector<16x32xf32>
    %c0_44 = arith.constant 0 : index
    %c0_45 = arith.constant 0 : index
    %137 = vector.load %arg19[%c0_44, %c0_45] : memref<16x32xf32, #tpu.memory_space<vmem>>, vector<16x32xf32>
    tpu.vector_store %arg19[%c0_44, %c0_45], %136 {strides = array<i32>} : memref<16x32xf32, #tpu.memory_space<vmem>>, vector<16x32xf32>,
    %c1_i32 = arith.constant 1 : i32
    %138 = arith.cmpi eq, %arg1, %c1_i32 : i32
    %139 = arith.extui %138 : i1 to i32
    %c0_i32_46 = arith.constant 0 : i32
    %140 = arith.cmpi ne, %139, %c0_i32_46 : i32
    scf.if %140 {
      %141 = vector.shape_cast %136 : vector<16x32xf32> to vector<2x8x32xf32>
      %cst_47 = arith.constant dense<0.000000e+00> : vector<2x32xf32>
      %142 = vector.multi_reduction <add>, %141, %cst_47 [1] : vector<2x8x32xf32> to vector<2x32xf32>
      %cst_48 = arith.constant 8.000000e+00 : f32
      %143 = vector.broadcast %cst_48 : f32 to vector<2x32xf32>
      %144 = arith.divf %142, %143 : vector<2x32xf32>
      %145 = arith.truncf %144 : vector<2x32xf32> to vector<2x32xbf16>
      %c0_49 = arith.constant 0 : index
      %c0_50 = arith.constant 0 : index
      %146 = vector.load %arg16[%c0_49, %c0_50] : memref<32x128xbf16, #tpu.memory_space<vmem>>, vector<32x128xbf16>
      %cst_51 = arith.constant dense<0.000000e+00> : vector<2x128xf32>
      %147 = tpu.matmul %145, %146, %cst_51 {dimension_numbers = #tpu.dot_dimension_numbers<[1], [0], [0], [1], [0, 0, 1, 1], [], []>} : vector<2x32xbf16>, vector<32x128xbf16>, vector<2x128xf32> -> vector<2x128xf32>
      %c0_52 = arith.constant 0 : index
      %c0_53 = arith.constant 0 : index
      %148 = vector.load %arg17[%c0_52, %c0_53] : memref<1x128xf32, #tpu.memory_space<vmem>>, vector<1x128xf32>
      %149 = vector.broadcast %148 : vector<1x128xf32> to vector<2x128xf32>
      %150 = arith.addf %147, %149 : vector<2x128xf32>
      %151 = arith.negf %150 : vector<2x128xf32>
      %152 = math.exp %151 : vector<2x128xf32>
      %cst_54 = arith.constant 1.000000e+00 : f32
      %153 = vector.broadcast %cst_54 : f32 to vector<2x128xf32>
      %154 = arith.addf %153, %152 : vector<2x128xf32>
      %155 = arith.divf %153, %154 : vector<2x128xf32>
      %c0_55 = arith.constant 0 : index
      %c0_56 = arith.constant 0 : index
      %156 = vector.load %arg18[%c0_55, %c0_56] : memref<2x128xf32, #tpu.memory_space<vmem>>, vector<2x128xf32>
      tpu.vector_store %arg18[%c0_55, %c0_56], %155 {strides = array<i32>} : memref<2x128xf32, #tpu.memory_space<vmem>>, vector<2x128xf32>,
    } else {
    }
    return
  }
  func.func @transform_0(%arg0: i32, %arg1: i32) -> (i32, i32) {
    %c0_i32 = arith.constant 0 : i32
    %c0_i32_0 = arith.constant 0 : i32
    return %arg0, %c0_i32 : i32, i32
  }
  func.func @transform_1(%arg0: i32, %arg1: i32) -> (i32, i32) {
    %c0_i32 = arith.constant 0 : i32
    %c0_i32_0 = arith.constant 0 : i32
    %c0_i32_1 = arith.constant 0 : i32
    return %c0_i32, %c0_i32_0 : i32, i32
  }
  func.func @transform_2(%arg0: i32, %arg1: i32) -> (i32, i32, i32) {
    %c0_i32 = arith.constant 0 : i32
    %c0_i32_0 = arith.constant 0 : i32
    %c0_i32_1 = arith.constant 0 : i32
    %c0_i32_2 = arith.constant 0 : i32
    return %c0_i32, %c0_i32_0, %c0_i32_1 : i32, i32, i32
  }
  func.func @transform_3(%arg0: i32, %arg1: i32) -> (i32, i32, i32) {
    %c0_i32 = arith.constant 0 : i32
    %c0_i32_0 = arith.constant 0 : i32
    %c0_i32_1 = arith.constant 0 : i32
    %c0_i32_2 = arith.constant 0 : i32
    return %c0_i32, %c0_i32_0, %c0_i32_1 : i32, i32, i32
  }
  func.func @transform_4(%arg0: i32, %arg1: i32) -> (i32, i32, i32) {
    %c0_i32 = arith.constant 0 : i32
    %c0_i32_0 = arith.constant 0 : i32
    %c0_i32_1 = arith.constant 0 : i32
    %c0_i32_2 = arith.constant 0 : i32
    return %c0_i32, %c0_i32_0, %c0_i32_1 : i32, i32, i32
  }
  func.func @transform_5(%arg0: i32, %arg1: i32) -> (i32, i32, i32) {
    %c0_i32 = arith.constant 0 : i32
    %c0_i32_0 = arith.constant 0 : i32
    %c0_i32_1 = arith.constant 0 : i32
    %c0_i32_2 = arith.constant 0 : i32
    return %c0_i32, %c0_i32_0, %c0_i32_1 : i32, i32, i32
  }
  func.func @transform_6(%arg0: i32, %arg1: i32) -> (i32, i32, i32) {
    %c0_i32 = arith.constant 0 : i32
    %c0_i32_0 = arith.constant 0 : i32
    %c0_i32_1 = arith.constant 0 : i32
    %c0_i32_2 = arith.constant 0 : i32
    return %c0_i32, %c0_i32_0, %c0_i32_1 : i32, i32, i32
  }
  func.func @transform_7(%arg0: i32, %arg1: i32) -> (i32, i32, i32) {
    %c0_i32 = arith.constant 0 : i32
    %c0_i32_0 = arith.constant 0 : i32
    %c0_i32_1 = arith.constant 0 : i32
    %c0_i32_2 = arith.constant 0 : i32
    return %c0_i32, %c0_i32_0, %c0_i32_1 : i32, i32, i32
  }
  func.func @transform_8(%arg0: i32, %arg1: i32) -> (i32, i32, i32) {
    %c0_i32 = arith.constant 0 : i32
    %c0_i32_0 = arith.constant 0 : i32
    %c0_i32_1 = arith.constant 0 : i32
    %c0_i32_2 = arith.constant 0 : i32
    return %c0_i32, %c0_i32_0, %c0_i32_1 : i32, i32, i32
  }
  func.func @transform_9(%arg0: i32, %arg1: i32) -> (i32, i32, i32) {
    %c0_i32 = arith.constant 0 : i32
    %c0_i32_0 = arith.constant 0 : i32
    %c0_i32_1 = arith.constant 0 : i32
    %c0_i32_2 = arith.constant 0 : i32
    return %c0_i32, %c0_i32_0, %c0_i32_1 : i32, i32, i32
  }
  func.func @transform_10(%arg0: i32, %arg1: i32) -> (i32, i32, i32) {
    %c0_i32 = arith.constant 0 : i32
    %c0_i32_0 = arith.constant 0 : i32
    %c0_i32_1 = arith.constant 0 : i32
    %c0_i32_2 = arith.constant 0 : i32
    return %c0_i32, %c0_i32_0, %c0_i32_1 : i32, i32, i32
  }
  func.func @transform_11(%arg0: i32, %arg1: i32) -> (i32, i32, i32) {
    %c0_i32 = arith.constant 0 : i32
    %c0_i32_0 = arith.constant 0 : i32
    %c0_i32_1 = arith.constant 0 : i32
    %c0_i32_2 = arith.constant 0 : i32
    return %c0_i32, %c0_i32_0, %c0_i32_1 : i32, i32, i32
  }
  func.func @transform_12(%arg0: i32, %arg1: i32) -> (i32, i32, i32) {
    %c0_i32 = arith.constant 0 : i32
    %c0_i32_0 = arith.constant 0 : i32
    %c0_i32_1 = arith.constant 0 : i32
    %c0_i32_2 = arith.constant 0 : i32
    return %c0_i32, %c0_i32_0, %c0_i32_1 : i32, i32, i32
  }
  func.func @transform_13(%arg0: i32, %arg1: i32) -> (i32, i32, i32) {
    %c0_i32 = arith.constant 0 : i32
    %c0_i32_0 = arith.constant 0 : i32
    %c0_i32_1 = arith.constant 0 : i32
    %c0_i32_2 = arith.constant 0 : i32
    return %c0_i32, %c0_i32_0, %c0_i32_1 : i32, i32, i32
  }
  func.func @transform_14(%arg0: i32, %arg1: i32) -> (i32, i32) {
    %c0_i32 = arith.constant 0 : i32
    %c0_i32_0 = arith.constant 0 : i32
    %c0_i32_1 = arith.constant 0 : i32
    return %c0_i32, %c0_i32_0 : i32, i32
  }
  func.func @transform_15(%arg0: i32, %arg1: i32) -> (i32, i32) {
    %c0_i32 = arith.constant 0 : i32
    %c0_i32_0 = arith.constant 0 : i32
    %c0_i32_1 = arith.constant 0 : i32
    return %c0_i32, %c0_i32_0 : i32, i32
  }
  func.func @transform_16(%arg0: i32, %arg1: i32) -> (i32, i32) {
    %c0_i32 = arith.constant 0 : i32
    %c0_i32_0 = arith.constant 0 : i32
    return %arg0, %c0_i32 : i32, i32
  }
}

</mosaic_0001>

<llo_original>
// kernel: tpu_custom_call.1
$region0: #{tpu_custom_call.1}
  #allocation0 [shape = 'u32[]', space=smem, size = 0x4, offset = 0x4, fixed_abs, tag = 'smem constant byte address 0x4 - core index']
  #allocation1 [shape = 'u32[144,128]{1,0:T(1,128)}', space=vmem, size = 0x12000, scoped, tag = 'internal scratch']
  #allocation2 [shape = 'f32[16,32]{1,0:T(8,128)}', space=vmem, size = 0x2000, scoped, tag = 'scratch operand']
  %s0 = inlined_call_operand.hbm [shape: f32[16,32], index: 0, kind: input, shape index: {}]
  %s1 = inlined_call_operand.hbm [shape: f32[8,32], index: 1, kind: input, shape index: {}]
  %s2 = inlined_call_operand.vmem [shape: bf16[2,32,96], index: 2, kind: input, shape index: {}]
  %s3 = inlined_call_operand.hbm [shape: f32[2,1,96], index: 3, kind: input, shape index: {}]
  %s4 = inlined_call_operand.vmem [shape: bf16[2,32,32], index: 4, kind: input, shape index: {}]
  %s5 = inlined_call_operand.hbm [shape: f32[2,1,32], index: 5, kind: input, shape index: {}]
  %s6 = inlined_call_operand.hbm [shape: f32[2,1,32], index: 6, kind: input, shape index: {}]
  %s7 = inlined_call_operand.hbm [shape: f32[2,1,32], index: 7, kind: input, shape index: {}]
  %s8 = inlined_call_operand.vmem [shape: bf16[2,32,64], index: 8, kind: input, shape index: {}]
  %s9 = inlined_call_operand.hbm [shape: f32[2,1,64], index: 9, kind: input, shape index: {}]
  %s10 = inlined_call_operand.vmem [shape: bf16[2,64,32], index: 10, kind: input, shape index: {}]
  %s11 = inlined_call_operand.hbm [shape: f32[2,1,32], index: 11, kind: input, shape index: {}]
  %s12 = inlined_call_operand.hbm [shape: f32[2,1,32], index: 12, kind: input, shape index: {}]
  %s13 = inlined_call_operand.hbm [shape: f32[2,1,32], index: 13, kind: input, shape index: {}]
  %s14 = inlined_call_operand.vmem [shape: bf16[32,128], index: 14, kind: input, shape index: {}]
  %s15 = inlined_call_operand.vmem [shape: f32[1,128], index: 15, kind: input, shape index: {}]
  %s16 = inlined_call_operand.hbm [shape: f32[2,128], index: 16, kind: output, shape index: {}]
  %s17 = sld [smem:[#allocation0]]
  $region145: #{tpu_custom_call.1} parent=0
    _
  %s19 = ssub.s32 1, %s17
  %s20 = scalar_select 0, %s19, %s17
  $region1: #{tpu_custom_call.1} parent=0
    #allocation3 [shape = 'u8[8192]{0}', space=vmem, size = 0x2000, scoped, tag = 'input window, operand 0, single buffered']
    #allocation4 [shape = 's32[2]{0}', space=sflag, size = 0x8, scoped, tag = 'scoped memory for tpu_custom_call.1']
    #allocation5 [shape = 's32[2]{0}', space=sflag, size = 0x8, scoped, tag = 'scoped memory for tpu_custom_call.1']
    #allocation6 [shape = 'u8[4096]{0}', space=vmem, size = 0x1000, scoped, tag = 'input window, operand 1, single buffered']
    #allocation7 [shape = 's32[1]{0}', space=sflag, size = 0x4, scoped, tag = 'scoped memory for tpu_custom_call.1']
    #allocation8 [shape = 'u8[1024]{0}', space=vmem, size = 0x400, scoped, tag = 'input window, operand 3, single buffered']
    #allocation9 [shape = 'u8[1024]{0}', space=vmem, size = 0x400, scoped, tag = 'input window, operand 5, single buffered']
    #allocation10 [shape = 's32[1]{0}', space=sflag, size = 0x4, scoped, tag = 'scoped memory for tpu_custom_call.1']
    #allocation11 [shape = 'u8[1024]{0}', space=vmem, size = 0x400, scoped, tag = 'input window, operand 6, single buffered']
    #allocation12 [shape = 'u8[1024]{0}', space=vmem, size = 0x400, scoped, tag = 'input window, operand 7, single buffered']
    #allocation13 [shape = 's32[1]{0}', space=sflag, size = 0x4, scoped, tag = 'scoped memory for tpu_custom_call.1']
    #allocation14 [shape = 'u8[1024]{0}', space=vmem, size = 0x400, scoped, tag = 'input window, operand 9, single buffered']
    #allocation15 [shape = 'u8[1024]{0}', space=vmem, size = 0x400, scoped, tag = 'input window, operand 11, single buffered']
    #allocation16 [shape = 's32[1]{0}', space=sflag, size = 0x4, scoped, tag = 'scoped memory for tpu_custom_call.1']
    #allocation17 [shape = 'u8[1024]{0}', space=vmem, size = 0x400, scoped, tag = 'input window, operand 12, single buffered']
    #allocation18 [shape = 'u8[1024]{0}', space=vmem, size = 0x400, scoped, tag = 'input window, operand 13, single buffered']
    #allocation19 [shape = 's32[1]{0}', space=sflag, size = 0x4, scoped, tag = 'scoped memory for tpu_custom_call.1']
    #allocation20 [shape = 'u8[1024]{0}', space=vmem, size = 0x400, scoped, tag = 'output window, operand 0, single buffered']
    %21 = vsyncpa [#allocation4], 0
    %22 = vsyncpa [#allocation7], 0
    %23 = vsyncpa [#allocation10], 0
    %24 = vsyncpa [#allocation13], 0
    %25 = vsyncpa [#allocation16], 0
    %26 = vsyncpa [#allocation19], 0
    %27 = vsyncpa [#allocation5], 0
    loop: start=0, step=1, limit=4
    $region2: #{tpu_custom_call.1} parent=1 // loop_pre_header
      _
    $region3: #{tpu_custom_call.1} parent=1 // loop_header
      %s29 = sphi 0, %s33
      %p30 = scmp.ge.s32.totalorder %s29, 4
      %s36 = sphi 0, %s48
      %s37 = sphi 0, %s44
      %s38 = sphi 0, %s36
      %s39 = sphi 0, %s37
      %s40 = sphi 0, %s38
      %s41 = sphi 0, %s39
      %s51 = sphi 0, %s53
      %s54 = sphi 0, %s51
      %s55 = sphi 0, %s54
      %s71 = sphi 0, %s55
      %s75 = sphi 0, %s75
      %s77 = sphi 0, %s75
      %s78 = sphi 0, %s77
      %s92 = sphi 0, %s78
      %s96 = sphi 0, %s96
      %s98 = sphi 0, %s96
      %s99 = sphi 0, %s98
      %s113 = sphi 0, %s99
      %s117 = sphi 0, %s117
      %s119 = sphi 0, %s117
      %s120 = sphi 0, %s119
      %s134 = sphi 0, %s120
      %s138 = sphi 0, %s138
      %s140 = sphi 0, %s138
      %s141 = sphi 0, %s140
      %s155 = sphi 0, %s141
      %s159 = sphi 0, %s159
      %s161 = sphi 0, %s159
      %s162 = sphi 0, %s161
      %s176 = sphi 0, %s162
      %s180 = sphi 0, %s180
      %s182 = sphi 0, %s180
      %s183 = sphi 0, %s182
      %s197 = sphi 0, %s183
      %s201 = sphi 0, %s201
      %s203 = sphi 0, %s201
      %s204 = sphi 0, %s203
      %s218 = sphi 0, %s204
      %s222 = sphi 0, %s222
      %s224 = sphi 0, %s222
      %s225 = sphi 0, %s224
      %s239 = sphi 0, %s225
      %s243 = sphi 0, %s243
      %s245 = sphi 0, %s243
      %s246 = sphi 0, %s245
      %s260 = sphi 0, %s246
      %s264 = sphi 0, %s264
      %s266 = sphi 0, %s264
      %s267 = sphi 0, %s266
      %s281 = sphi 0, %s267
      %s285 = sphi 0, %s285
      %s287 = sphi 0, %s285
      %s288 = sphi 0, %s287
      %s302 = sphi 0, %s288
      %s306 = sphi 0, %s306
      %s308 = sphi 0, %s306
      %s309 = sphi 0, %s308
      %s323 = sphi 0, %s309
      %s327 = sphi 0, %s327
      %s329 = sphi 0, %s327
      %s330 = sphi 0, %s329
      %s344 = sphi 0, %s330
      %s348 = sphi 0, %s348
      %s350 = sphi 0, %s348
      %s351 = sphi 0, %s350
      %s365 = sphi 0, %s351
      %s369 = sphi 0, %s369
      %s371 = sphi 0, %s369
      %s372 = sphi 0, %s371
      %s386 = sphi 0, %s372
      %s392 = sphi 0, %s394
      %s395 = sphi 0, %s392
      %s396 = sphi 0, %s395
      %s412 = sphi 0, %s396
    $region4: #{tpu_custom_call.1} parent=1 // loop_header_branch
      %32 = sbr.rel (%p30) target = $region8
    $region5: #{tpu_custom_call.1} parent=1 // loop_body
      %s34 = ssub.s32 %s29, 1
      %s35 = ssub.s32 %s29, 2
      %s42 = sadd.s32 1, %s37
      %p43 = scmp.ge.s32.totalorder %s42, 2
      %s44 = scalar_select %p43, 0, %s42
      %s45 = sadd.s32 1, %s36
      %s46 = scalar_select %p43, %s45, %s36
      %p47 = scmp.ge.s32.totalorder %s46, 1
      %s48 = scalar_select %p47, 0, %s46
      %s49 = ssub.s32 %s36, %s48
      %p50 = scmp.eq.s32.totalorder %s49, 0
      %s52 = sadd.s32 %s51, 1
      %s53 = scalar_select %p50, %s51, %s52
      %p56 = pneg %p50
      %p57 = scmp.eq.s32.totalorder %s29, 1
      %p58 = por %p56, %p57
      %p59 = scmp.ne.s32.totalorder %s51, %s54
      %p60 = scmp.eq.s32.totalorder %s29, 0
      %p61 = por %p59, %p60
      %p62 = scmp.ne.s32.totalorder %s51, %s54
      %p63 = scmp.eq.s32.totalorder %s34, 1
      %p64 = por %p62, %p63
      %p65 = scmp.ne.s32.totalorder %s54, %s55
      %p66 = scmp.eq.s32.totalorder %s34, 0
      %p67 = por %p65, %p66
      %p68 = scmp.ne.s32.totalorder %s54, %s55
      %p69 = scmp.eq.s32.totalorder %s35, 1
      %p70 = por %p68, %p69
      %p72 = scmp.ne.s32.totalorder %s55, %s71
      %p73 = scmp.eq.s32.totalorder %s35, 0
      %p74 = por %p72, %p73
      %s76 = sadd.s32 %s75, 1
      %p79 = scmp.eq.s32.totalorder %s29, 1
      %p80 = scmp.ne.s32.totalorder %s75, %s77
      %p81 = scmp.eq.s32.totalorder %s29, 0
      %p82 = por %p80, %p81
      %p83 = scmp.ne.s32.totalorder %s75, %s77
      %p84 = scmp.eq.s32.totalorder %s34, 1
      %p85 = por %p83, %p84
      %p86 = scmp.ne.s32.totalorder %s77, %s78
      %p87 = scmp.eq.s32.totalorder %s34, 0
      %p88 = por %p86, %p87
      %p89 = scmp.ne.s32.totalorder %s77, %s78
      %p90 = scmp.eq.s32.totalorder %s35, 1
      %p91 = por %p89, %p90
      %p93 = scmp.ne.s32.totalorder %s78, %s92
      %p94 = scmp.eq.s32.totalorder %s35, 0
      %p95 = por %p93, %p94
      %s97 = sadd.s32 %s96, 1
      %p100 = scmp.eq.s32.totalorder %s29, 1
      %p101 = scmp.ne.s32.totalorder %s96, %s98
      %p102 = scmp.eq.s32.totalorder %s29, 0
      %p103 = por %p101, %p102
      %p104 = scmp.ne.s32.totalorder %s96, %s98
      %p105 = scmp.eq.s32.totalorder %s34, 1
      %p106 = por %p104, %p105
      %p107 = scmp.ne.s32.totalorder %s98, %s99
      %p108 = scmp.eq.s32.totalorder %s34, 0
      %p109 = por %p107, %p108
      %p110 = scmp.ne.s32.totalorder %s98, %s99
      %p111 = scmp.eq.s32.totalorder %s35, 1
      %p112 = por %p110, %p111
      %p114 = scmp.ne.s32.totalorder %s99, %s113
      %p115 = scmp.eq.s32.totalorder %s35, 0
      %p116 = por %p114, %p115
      %s118 = sadd.s32 %s117, 1
      %p121 = scmp.eq.s32.totalorder %s29, 1
      %p122 = scmp.ne.s32.totalorder %s117, %s119
      %p123 = scmp.eq.s32.totalorder %s29, 0
      %p124 = por %p122, %p123
      %p125 = scmp.ne.s32.totalorder %s117, %s119
      %p126 = scmp.eq.s32.totalorder %s34, 1
      %p127 = por %p125, %p126
      %p128 = scmp.ne.s32.totalorder %s119, %s120
      %p129 = scmp.eq.s32.totalorder %s34, 0
      %p130 = por %p128, %p129
      %p131 = scmp.ne.s32.totalorder %s119, %s120
      %p132 = scmp.eq.s32.totalorder %s35, 1
      %p133 = por %p131, %p132
      %p135 = scmp.ne.s32.totalorder %s120, %s134
      %p136 = scmp.eq.s32.totalorder %s35, 0
      %p137 = por %p135, %p136
      %s139 = sadd.s32 %s138, 1
      %p142 = scmp.eq.s32.totalorder %s29, 1
      %p143 = scmp.ne.s32.totalorder %s138, %s140
      %p144 = scmp.eq.s32.totalorder %s29, 0
      %p145 = por %p143, %p144
      %p146 = scmp.ne.s32.totalorder %s138, %s140
      %p147 = scmp.eq.s32.totalorder %s34, 1
      %p148 = por %p146, %p147
      %p149 = scmp.ne.s32.totalorder %s140, %s141
      %p150 = scmp.eq.s32.totalorder %s34, 0
      %p151 = por %p149, %p150
      %p152 = scmp.ne.s32.totalorder %s140, %s141
      %p153 = scmp.eq.s32.totalorder %s35, 1
      %p154 = por %p152, %p153
      %p156 = scmp.ne.s32.totalorder %s141, %s155
      %p157 = scmp.eq.s32.totalorder %s35, 0
      %p158 = por %p156, %p157
      %s160 = sadd.s32 %s159, 1
      %p163 = scmp.eq.s32.totalorder %s29, 1
      %p164 = scmp.ne.s32.totalorder %s159, %s161
      %p165 = scmp.eq.s32.totalorder %s29, 0
      %p166 = por %p164, %p165
      %p167 = scmp.ne.s32.totalorder %s159, %s161
      %p168 = scmp.eq.s32.totalorder %s34, 1
      %p169 = por %p167, %p168
      %p170 = scmp.ne.s32.totalorder %s161, %s162
      %p171 = scmp.eq.s32.totalorder %s34, 0
      %p172 = por %p170, %p171
      %p173 = scmp.ne.s32.totalorder %s161, %s162
      %p174 = scmp.eq.s32.totalorder %s35, 1
      %p175 = por %p173, %p174
      %p177 = scmp.ne.s32.totalorder %s162, %s176
      %p178 = scmp.eq.s32.totalorder %s35, 0
      %p179 = por %p177, %p178
      %s181 = sadd.s32 %s180, 1
      %p184 = scmp.eq.s32.totalorder %s29, 1
      %p185 = scmp.ne.s32.totalorder %s180, %s182
      %p186 = scmp.eq.s32.totalorder %s29, 0
      %p187 = por %p185, %p186
      %p188 = scmp.ne.s32.totalorder %s180, %s182
      %p189 = scmp.eq.s32.totalorder %s34, 1
      %p190 = por %p188, %p189
      %p191 = scmp.ne.s32.totalorder %s182, %s183
      %p192 = scmp.eq.s32.totalorder %s34, 0
      %p193 = por %p191, %p192
      %p194 = scmp.ne.s32.totalorder %s182, %s183
      %p195 = scmp.eq.s32.totalorder %s35, 1
      %p196 = por %p194, %p195
      %p198 = scmp.ne.s32.totalorder %s183, %s197
      %p199 = scmp.eq.s32.totalorder %s35, 0
      %p200 = por %p198, %p199
      %s202 = sadd.s32 %s201, 1
      %p205 = scmp.eq.s32.totalorder %s29, 1
      %p206 = scmp.ne.s32.totalorder %s201, %s203
      %p207 = scmp.eq.s32.totalorder %s29, 0
      %p208 = por %p206, %p207
      %p209 = scmp.ne.s32.totalorder %s201, %s203
      %p210 = scmp.eq.s32.totalorder %s34, 1
      %p211 = por %p209, %p210
      %p212 = scmp.ne.s32.totalorder %s203, %s204
      %p213 = scmp.eq.s32.totalorder %s34, 0
      %p214 = por %p212, %p213
      %p215 = scmp.ne.s32.totalorder %s203, %s204
      %p216 = scmp.eq.s32.totalorder %s35, 1
      %p217 = por %p215, %p216
      %p219 = scmp.ne.s32.totalorder %s204, %s218
      %p220 = scmp.eq.s32.totalorder %s35, 0
      %p221 = por %p219, %p220
      %s223 = sadd.s32 %s222, 1
      %p226 = scmp.eq.s32.totalorder %s29, 1
      %p227 = scmp.ne.s32.totalorder %s222, %s224
      %p228 = scmp.eq.s32.totalorder %s29, 0
      %p229 = por %p227, %p228
      %p230 = scmp.ne.s32.totalorder %s222, %s224
      %p231 = scmp.eq.s32.totalorder %s34, 1
      %p232 = por %p230, %p231
      %p233 = scmp.ne.s32.totalorder %s224, %s225
      %p234 = scmp.eq.s32.totalorder %s34, 0
      %p235 = por %p233, %p234
      %p236 = scmp.ne.s32.totalorder %s224, %s225
      %p237 = scmp.eq.s32.totalorder %s35, 1
      %p238 = por %p236, %p237
      %p240 = scmp.ne.s32.totalorder %s225, %s239
      %p241 = scmp.eq.s32.totalorder %s35, 0
      %p242 = por %p240, %p241
      %s244 = sadd.s32 %s243, 1
      %p247 = scmp.eq.s32.totalorder %s29, 1
      %p248 = scmp.ne.s32.totalorder %s243, %s245
      %p249 = scmp.eq.s32.totalorder %s29, 0
      %p250 = por %p248, %p249
      %p251 = scmp.ne.s32.totalorder %s243, %s245
      %p252 = scmp.eq.s32.totalorder %s34, 1
      %p253 = por %p251, %p252
      %p254 = scmp.ne.s32.totalorder %s245, %s246
      %p255 = scmp.eq.s32.totalorder %s34, 0
      %p256 = por %p254, %p255
      %p257 = scmp.ne.s32.totalorder %s245, %s246
      %p258 = scmp.eq.s32.totalorder %s35, 1
      %p259 = por %p257, %p258
      %p261 = scmp.ne.s32.totalorder %s246, %s260
      %p262 = scmp.eq.s32.totalorder %s35, 0
      %p263 = por %p261, %p262
      %s265 = sadd.s32 %s264, 1
      %p268 = scmp.eq.s32.totalorder %s29, 1
      %p269 = scmp.ne.s32.totalorder %s264, %s266
      %p270 = scmp.eq.s32.totalorder %s29, 0
      %p271 = por %p269, %p270
      %p272 = scmp.ne.s32.totalorder %s264, %s266
      %p273 = scmp.eq.s32.totalorder %s34, 1
      %p274 = por %p272, %p273
      %p275 = scmp.ne.s32.totalorder %s266, %s267
      %p276 = scmp.eq.s32.totalorder %s34, 0
      %p277 = por %p275, %p276
      %p278 = scmp.ne.s32.totalorder %s266, %s267
      %p279 = scmp.eq.s32.totalorder %s35, 1
      %p280 = por %p278, %p279
      %p282 = scmp.ne.s32.totalorder %s267, %s281
      %p283 = scmp.eq.s32.totalorder %s35, 0
      %p284 = por %p282, %p283
      %s286 = sadd.s32 %s285, 1
      %p289 = scmp.eq.s32.totalorder %s29, 1
      %p290 = scmp.ne.s32.totalorder %s285, %s287
      %p291 = scmp.eq.s32.totalorder %s29, 0
      %p292 = por %p290, %p291
      %p293 = scmp.ne.s32.totalorder %s285, %s287
      %p294 = scmp.eq.s32.totalorder %s34, 1
      %p295 = por %p293, %p294
      %p296 = scmp.ne.s32.totalorder %s287, %s288
      %p297 = scmp.eq.s32.totalorder %s34, 0
      %p298 = por %p296, %p297
      %p299 = scmp.ne.s32.totalorder %s287, %s288
      %p300 = scmp.eq.s32.totalorder %s35, 1
      %p301 = por %p299, %p300
      %p303 = scmp.ne.s32.totalorder %s288, %s302
      %p304 = scmp.eq.s32.totalorder %s35, 0
      %p305 = por %p303, %p304
      %s307 = sadd.s32 %s306, 1
      %p310 = scmp.eq.s32.totalorder %s29, 1
      %p311 = scmp.ne.s32.totalorder %s306, %s308
      %p312 = scmp.eq.s32.totalorder %s29, 0
      %p313 = por %p311, %p312
      %p314 = scmp.ne.s32.totalorder %s306, %s308
      %p315 = scmp.eq.s32.totalorder %s34, 1
      %p316 = por %p314, %p315
      %p317 = scmp.ne.s32.totalorder %s308, %s309
      %p318 = scmp.eq.s32.totalorder %s34, 0
      %p319 = por %p317, %p318
      %p320 = scmp.ne.s32.totalorder %s308, %s309
      %p321 = scmp.eq.s32.totalorder %s35, 1
      %p322 = por %p320, %p321
      %p324 = scmp.ne.s32.totalorder %s309, %s323
      %p325 = scmp.eq.s32.totalorder %s35, 0
      %p326 = por %p324, %p325
      %s328 = sadd.s32 %s327, 1
      %p331 = scmp.eq.s32.totalorder %s29, 1
      %p332 = scmp.ne.s32.totalorder %s327, %s329
      %p333 = scmp.eq.s32.totalorder %s29, 0
      %p334 = por %p332, %p333
      %p335 = scmp.ne.s32.totalorder %s327, %s329
      %p336 = scmp.eq.s32.totalorder %s34, 1
      %p337 = por %p335, %p336
      %p338 = scmp.ne.s32.totalorder %s329, %s330
      %p339 = scmp.eq.s32.totalorder %s34, 0
      %p340 = por %p338, %p339
      %p341 = scmp.ne.s32.totalorder %s329, %s330
      %p342 = scmp.eq.s32.totalorder %s35, 1
      %p343 = por %p341, %p342
      %p345 = scmp.ne.s32.totalorder %s330, %s344
      %p346 = scmp.eq.s32.totalorder %s35, 0
      %p347 = por %p345, %p346
      %s349 = sadd.s32 %s348, 1
      %p352 = scmp.eq.s32.totalorder %s29, 1
      %p353 = scmp.ne.s32.totalorder %s348, %s350
      %p354 = scmp.eq.s32.totalorder %s29, 0
      %p355 = por %p353, %p354
      %p356 = scmp.ne.s32.totalorder %s348, %s350
      %p357 = scmp.eq.s32.totalorder %s34, 1
      %p358 = por %p356, %p357
      %p359 = scmp.ne.s32.totalorder %s350, %s351
      %p360 = scmp.eq.s32.totalorder %s34, 0
      %p361 = por %p359, %p360
      %p362 = scmp.ne.s32.totalorder %s350, %s351
      %p363 = scmp.eq.s32.totalorder %s35, 1
      %p364 = por %p362, %p363
      %p366 = scmp.ne.s32.totalorder %s351, %s365
      %p367 = scmp.eq.s32.totalorder %s35, 0
      %p368 = por %p366, %p367
      %s370 = sadd.s32 %s369, 1
      %p373 = scmp.eq.s32.totalorder %s29, 1
      %p374 = scmp.ne.s32.totalorder %s369, %s371
      %p375 = scmp.eq.s32.totalorder %s29, 0
      %p376 = por %p374, %p375
      %p377 = scmp.ne.s32.totalorder %s369, %s371
      %p378 = scmp.eq.s32.totalorder %s34, 1
      %p379 = por %p377, %p378
      %p380 = scmp.ne.s32.totalorder %s371, %s372
      %p381 = scmp.eq.s32.totalorder %s34, 0
      %p382 = por %p380, %p381
      %p383 = scmp.ne.s32.totalorder %s371, %s372
      %p384 = scmp.eq.s32.totalorder %s35, 1
      %p385 = por %p383, %p384
      %p387 = scmp.ne.s32.totalorder %s372, %s386
      %p388 = scmp.eq.s32.totalorder %s35, 0
      %p389 = por %p387, %p388
      %s390 = ssub.s32 %s36, %s48
      %p391 = scmp.eq.s32.totalorder %s390, 0
      %s393 = sadd.s32 %s392, 1
      %s394 = scalar_select %p391, %s392, %s393
      %p397 = pneg %p391
      %p398 = scmp.eq.s32.totalorder %s29, 1
      %p399 = por %p397, %p398
      %p400 = scmp.ne.s32.totalorder %s392, %s395
      %p401 = scmp.eq.s32.totalorder %s29, 0
      %p402 = por %p400, %p401
      %p403 = scmp.ne.s32.totalorder %s392, %s395
      %p404 = scmp.eq.s32.totalorder %s34, 1
      %p405 = por %p403, %p404
      %p406 = scmp.ne.s32.totalorder %s395, %s396
      %p407 = scmp.eq.s32.totalorder %s34, 0
      %p408 = por %p406, %p407
      %p409 = scmp.ne.s32.totalorder %s395, %s396
      %p410 = scmp.eq.s32.totalorder %s35, 1
      %p411 = por %p409, %p410
      %p413 = scmp.ne.s32.totalorder %s396, %s412
      %p414 = scmp.eq.s32.totalorder %s35, 0
      %p415 = por %p413, %p414
      %p416 = scmp.le.s32.totalorder 1, %s29
      %p417 = scmp.lt.s32.totalorder %s29, 3
      %p418 = pnand %p416, %p417
      %p419 = pneg %p418
      // Predicated region
      $region9: #{tpu_custom_call.1} parent=5 // pred_check
        _
      $region10: #{tpu_custom_call.1} parent=5 // pred_check_branch
        %421 = sbr.rel (%p418) target = $region12
      $region11: #{tpu_custom_call.1} parent=5 // pred_region
        %s422 = ssub.s32 %s29, 1
        // Predicated region
        $region13: #{tpu_custom_call.1} parent=11 // pred_check
          %p423 = pneg %p67
        $region14: #{tpu_custom_call.1} parent=11 // pred_check_branch
          %425 = sbr.rel (%p423) target = $region16
        $region15: #{tpu_custom_call.1} parent=11 // pred_region
          %s426 = smul.u32 2, %s38
          %s428 = ssub.s32 256, 256
          %429 = vsyncadd [#allocation4], %s428
          %s430 = smul.addr %s426, 128
          %s431 = scalar_lea.hbm %s0, %s430
          %s432 = sshll.u32 [#allocation3], 4
          %s433 = int_to_ptr.vmem [resolvable:$true] %s432
          %438 = dma.hbm_to_vmem [thread:$0]  %s431, 256, %s433, [#allocation4], 128, 128, 8
        $region16: #{tpu_custom_call.1} parent=11 // pred_fallthru
          _
        // Predicated region
        $region17: #{tpu_custom_call.1} parent=11 // pred_check
          %p439 = pneg %p88
        $region18: #{tpu_custom_call.1} parent=11 // pred_check_branch
          %441 = sbr.rel (%p439) target = $region20
        $region19: #{tpu_custom_call.1} parent=11 // pred_region
          %s443 = ssub.s32 128, 128
          %444 = vsyncadd [#allocation7], %s443
          %s446 = sshll.u32 [#allocation6], 4
          %s447 = int_to_ptr.vmem [resolvable:$true] %s446
          %449 = dma.hbm_to_vmem [thread:$0]  %s1, 128, %s447, [#allocation7]
        $region20: #{tpu_custom_call.1} parent=11 // pred_fallthru
          _
        // Predicated region
        $region21: #{tpu_custom_call.1} parent=11 // pred_check
          %p450 = pneg %p109
        $region22: #{tpu_custom_call.1} parent=11 // pred_check_branch
          %452 = sbr.rel (%p450) target = $region24
        $region23: #{tpu_custom_call.1} parent=11 // pred_region
          _
        $region24: #{tpu_custom_call.1} parent=11 // pred_fallthru
          _
        // Predicated region
        $region25: #{tpu_custom_call.1} parent=11 // pred_check
          %p453 = pneg %p130
        $region26: #{tpu_custom_call.1} parent=11 // pred_check_branch
          %455 = sbr.rel (%p453) target = $region28
        $region27: #{tpu_custom_call.1} parent=11 // pred_region
          %s457 = ssub.s32 32, 32
          %458 = vsyncadd [#allocation7], %s457
          %s459 = sshll.u32 [#allocation8], 4
          %s460 = int_to_ptr.vmem [resolvable:$true] %s459
          %465 = dma.hbm_to_vmem [thread:$0]  %s3, 32, %s460, [#allocation7], 16, 16, 1
        $region28: #{tpu_custom_call.1} parent=11 // pred_fallthru
          _
        // Predicated region
        $region29: #{tpu_custom_call.1} parent=11 // pred_check
          %p466 = pneg %p151
        $region30: #{tpu_custom_call.1} parent=11 // pred_check_branch
          %468 = sbr.rel (%p466) target = $region32
        $region31: #{tpu_custom_call.1} parent=11 // pred_region
          _
        $region32: #{tpu_custom_call.1} parent=11 // pred_fallthru
          _
        // Predicated region
        $region33: #{tpu_custom_call.1} parent=11 // pred_check
          %p469 = pneg %p172
        $region34: #{tpu_custom_call.1} parent=11 // pred_check_branch
          %471 = sbr.rel (%p469) target = $region36
        $region35: #{tpu_custom_call.1} parent=11 // pred_region
          %s473 = ssub.s32 32, 32
          %474 = vsyncadd [#allocation10], %s473
          %s475 = sshll.u32 [#allocation9], 4
          %s476 = int_to_ptr.vmem [resolvable:$true] %s475
          %481 = dma.hbm_to_vmem [thread:$0]  %s5, 32, %s476, [#allocation10], 16, 16, 1
        $region36: #{tpu_custom_call.1} parent=11 // pred_fallthru
          _
        // Predicated region
        $region37: #{tpu_custom_call.1} parent=11 // pred_check
          %p482 = pneg %p193
        $region38: #{tpu_custom_call.1} parent=11 // pred_check_branch
          %484 = sbr.rel (%p482) target = $region40
        $region39: #{tpu_custom_call.1} parent=11 // pred_region
          %s486 = ssub.s32 32, 32
          %487 = vsyncadd [#allocation10], %s486
          %s488 = sshll.u32 [#allocation11], 4
          %s489 = int_to_ptr.vmem [resolvable:$true] %s488
          %494 = dma.hbm_to_vmem [thread:$0]  %s6, 32, %s489, [#allocation10], 16, 16, 1
        $region40: #{tpu_custom_call.1} parent=11 // pred_fallthru
          _
        // Predicated region
        $region41: #{tpu_custom_call.1} parent=11 // pred_check
          %p495 = pneg %p214
        $region42: #{tpu_custom_call.1} parent=11 // pred_check_branch
          %497 = sbr.rel (%p495) target = $region44
        $region43: #{tpu_custom_call.1} parent=11 // pred_region
          %s499 = ssub.s32 32, 32
          %500 = vsyncadd [#allocation13], %s499
          %s501 = sshll.u32 [#allocation12], 4
          %s502 = int_to_ptr.vmem [resolvable:$true] %s501
          %507 = dma.hbm_to_vmem [thread:$0]  %s7, 32, %s502, [#allocation13], 16, 16, 1
        $region44: #{tpu_custom_call.1} parent=11 // pred_fallthru
          _
        // Predicated region
        $region45: #{tpu_custom_call.1} parent=11 // pred_check
          %p508 = pneg %p235
        $region46: #{tpu_custom_call.1} parent=11 // pred_check_branch
          %510 = sbr.rel (%p508) target = $region48
        $region47: #{tpu_custom_call.1} parent=11 // pred_region
          _
        $region48: #{tpu_custom_call.1} parent=11 // pred_fallthru
          _
        // Predicated region
        $region49: #{tpu_custom_call.1} parent=11 // pred_check
          %p511 = pneg %p256
        $region50: #{tpu_custom_call.1} parent=11 // pred_check_branch
          %513 = sbr.rel (%p511) target = $region52
        $region51: #{tpu_custom_call.1} parent=11 // pred_region
          %s515 = ssub.s32 32, 32
          %516 = vsyncadd [#allocation13], %s515
          %s517 = sshll.u32 [#allocation14], 4
          %s518 = int_to_ptr.vmem [resolvable:$true] %s517
          %523 = dma.hbm_to_vmem [thread:$0]  %s9, 32, %s518, [#allocation13], 16, 16, 1
        $region52: #{tpu_custom_call.1} parent=11 // pred_fallthru
          _
        // Predicated region
        $region53: #{tpu_custom_call.1} parent=11 // pred_check
          %p524 = pneg %p277
        $region54: #{tpu_custom_call.1} parent=11 // pred_check_branch
          %526 = sbr.rel (%p524) target = $region56
        $region55: #{tpu_custom_call.1} parent=11 // pred_region
          _
        $region56: #{tpu_custom_call.1} parent=11 // pred_fallthru
          _
        // Predicated region
        $region57: #{tpu_custom_call.1} parent=11 // pred_check
          %p527 = pneg %p298
        $region58: #{tpu_custom_call.1} parent=11 // pred_check_branch
          %529 = sbr.rel (%p527) target = $region60
        $region59: #{tpu_custom_call.1} parent=11 // pred_region
          %s531 = ssub.s32 32, 32
          %532 = vsyncadd [#allocation16], %s531
          %s533 = sshll.u32 [#allocation15], 4
          %s534 = int_to_ptr.vmem [resolvable:$true] %s533
          %539 = dma.hbm_to_vmem [thread:$0]  %s11, 32, %s534, [#allocation16], 16, 16, 1
        $region60: #{tpu_custom_call.1} parent=11 // pred_fallthru
          _
        // Predicated region
        $region61: #{tpu_custom_call.1} parent=11 // pred_check
          %p540 = pneg %p319
        $region62: #{tpu_custom_call.1} parent=11 // pred_check_branch
          %542 = sbr.rel (%p540) target = $region64
        $region63: #{tpu_custom_call.1} parent=11 // pred_region
          %s544 = ssub.s32 32, 32
          %545 = vsyncadd [#allocation16], %s544
          %s546 = sshll.u32 [#allocation17], 4
          %s547 = int_to_ptr.vmem [resolvable:$true] %s546
          %552 = dma.hbm_to_vmem [thread:$0]  %s12, 32, %s547, [#allocation16], 16, 16, 1
        $region64: #{tpu_custom_call.1} parent=11 // pred_fallthru
          _
        // Predicated region
        $region65: #{tpu_custom_call.1} parent=11 // pred_check
          %p553 = pneg %p340
        $region66: #{tpu_custom_call.1} parent=11 // pred_check_branch
          %555 = sbr.rel (%p553) target = $region68
        $region67: #{tpu_custom_call.1} parent=11 // pred_region
          %s557 = ssub.s32 32, 32
          %558 = vsyncadd [#allocation19], %s557
          %s559 = sshll.u32 [#allocation18], 4
          %s560 = int_to_ptr.vmem [resolvable:$true] %s559
          %565 = dma.hbm_to_vmem [thread:$0]  %s13, 32, %s560, [#allocation19], 16, 16, 1
        $region68: #{tpu_custom_call.1} parent=11 // pred_fallthru
          _
        // Predicated region
        $region69: #{tpu_custom_call.1} parent=11 // pred_check
          %p566 = pneg %p361
        $region70: #{tpu_custom_call.1} parent=11 // pred_check_branch
          %568 = sbr.rel (%p566) target = $region72
        $region71: #{tpu_custom_call.1} parent=11 // pred_region
          _
        $region72: #{tpu_custom_call.1} parent=11 // pred_fallthru
          _
        // Predicated region
        $region73: #{tpu_custom_call.1} parent=11 // pred_check
          %p569 = pneg %p382
        $region74: #{tpu_custom_call.1} parent=11 // pred_check_branch
          %571 = sbr.rel (%p569) target = $region76
        $region75: #{tpu_custom_call.1} parent=11 // pred_region
          _
        $region76: #{tpu_custom_call.1} parent=11 // pred_fallthru
          _
      $region12: #{tpu_custom_call.1} parent=5 // pred_fallthru
        _
      %p572 = scmp.lt.s32.totalorder %s29, 2
      // Predicated region
      $region77: #{tpu_custom_call.1} parent=5 // pred_check
        %p573 = pneg %p572
      $region78: #{tpu_custom_call.1} parent=5 // pred_check_branch
        %575 = sbr.rel (%p573) target = $region80
      $region79: #{tpu_custom_call.1} parent=5 // pred_region
        _
      $region80: #{tpu_custom_call.1} parent=5 // pred_fallthru
        _
      %p576 = scmp.le.s32.totalorder 1, %s29
      %p577 = scmp.lt.s32.totalorder %s29, 3
      %p578 = pnand %p576, %p577
      %p579 = pneg %p578
      // Predicated region
      $region81: #{tpu_custom_call.1} parent=5 // pred_check
        _
      $region82: #{tpu_custom_call.1} parent=5 // pred_check_branch
        %581 = sbr.rel (%p578) target = $region84
      $region83: #{tpu_custom_call.1} parent=5 // pred_region
        %s582 = ssub.s32 %s29, 1
        // Predicated region
        $region85: #{tpu_custom_call.1} parent=83 // pred_check
          %p583 = pneg %p67
        $region86: #{tpu_custom_call.1} parent=83 // pred_check_branch
          %585 = sbr.rel (%p583) target = $region88
        $region87: #{tpu_custom_call.1} parent=83 // pred_region
          %586 = dma.done [#allocation4], 256
        $region88: #{tpu_custom_call.1} parent=83 // pred_fallthru
          _
        // Predicated region
        $region89: #{tpu_custom_call.1} parent=83 // pred_check
          %p587 = pneg %p88
        $region90: #{tpu_custom_call.1} parent=83 // pred_check_branch
          %589 = sbr.rel (%p587) target = $region92
        $region91: #{tpu_custom_call.1} parent=83 // pred_region
          %590 = dma.done [#allocation7], 128
        $region92: #{tpu_custom_call.1} parent=83 // pred_fallthru
          _
        // Predicated region
        $region93: #{tpu_custom_call.1} parent=83 // pred_check
          %p591 = pneg %p130
        $region94: #{tpu_custom_call.1} parent=83 // pred_check_branch
          %593 = sbr.rel (%p591) target = $region96
        $region95: #{tpu_custom_call.1} parent=83 // pred_region
          %594 = dma.done [#allocation7], 32
        $region96: #{tpu_custom_call.1} parent=83 // pred_fallthru
          _
        // Predicated region
        $region97: #{tpu_custom_call.1} parent=83 // pred_check
          %p595 = pneg %p172
        $region98: #{tpu_custom_call.1} parent=83 // pred_check_branch
          %597 = sbr.rel (%p595) target = $region100
        $region99: #{tpu_custom_call.1} parent=83 // pred_region
          %598 = dma.done [#allocation10], 32
        $region100: #{tpu_custom_call.1} parent=83 // pred_fallthru
          _
        // Predicated region
        $region101: #{tpu_custom_call.1} parent=83 // pred_check
          %p599 = pneg %p193
        $region102: #{tpu_custom_call.1} parent=83 // pred_check_branch
          %601 = sbr.rel (%p599) target = $region104
        $region103: #{tpu_custom_call.1} parent=83 // pred_region
          %602 = dma.done [#allocation10], 32
        $region104: #{tpu_custom_call.1} parent=83 // pred_fallthru
          _
        // Predicated region
        $region105: #{tpu_custom_call.1} parent=83 // pred_check
          %p603 = pneg %p214
        $region106: #{tpu_custom_call.1} parent=83 // pred_check_branch
          %605 = sbr.rel (%p603) target = $region108
        $region107: #{tpu_custom_call.1} parent=83 // pred_region
          %606 = dma.done [#allocation13], 32
        $region108: #{tpu_custom_call.1} parent=83 // pred_fallthru
          _
        // Predicated region
        $region109: #{tpu_custom_call.1} parent=83 // pred_check
          %p607 = pneg %p256
        $region110: #{tpu_custom_call.1} parent=83 // pred_check_branch
          %609 = sbr.rel (%p607) target = $region112
        $region111: #{tpu_custom_call.1} parent=83 // pred_region
          %610 = dma.done [#allocation13], 32
        $region112: #{tpu_custom_call.1} parent=83 // pred_fallthru
          _
        // Predicated region
        $region113: #{tpu_custom_call.1} parent=83 // pred_check
          %p611 = pneg %p298
        $region114: #{tpu_custom_call.1} parent=83 // pred_check_branch
          %613 = sbr.rel (%p611) target = $region116
        $region115: #{tpu_custom_call.1} parent=83 // pred_region
          %614 = dma.done [#allocation16], 32
        $region116: #{tpu_custom_call.1} parent=83 // pred_fallthru
          _
        // Predicated region
        $region117: #{tpu_custom_call.1} parent=83 // pred_check
          %p615 = pneg %p319
        $region118: #{tpu_custom_call.1} parent=83 // pred_check_branch
          %617 = sbr.rel (%p615) target = $region120
        $region119: #{tpu_custom_call.1} parent=83 // pred_region
          %618 = dma.done [#allocation16], 32
        $region120: #{tpu_custom_call.1} parent=83 // pred_fallthru
          _
        // Predicated region
        $region121: #{tpu_custom_call.1} parent=83 // pred_check
          %p619 = pneg %p340
        $region122: #{tpu_custom_call.1} parent=83 // pred_check_branch
          %621 = sbr.rel (%p619) target = $region124
        $region123: #{tpu_custom_call.1} parent=83 // pred_region
          %622 = dma.done [#allocation19], 32
        $region124: #{tpu_custom_call.1} parent=83 // pred_fallthru
          _
        %p623 = pneg %p67
        %p624 = pneg %p64
        %p625 = pneg %p88
        %p626 = pneg %p85
        %p627 = pneg %p109
        %p628 = pneg %p106
        %p629 = pneg %p130
        %p630 = pneg %p127
        %p631 = pneg %p151
        %p632 = pneg %p148
        %p633 = pneg %p172
        %p634 = pneg %p169
        %p635 = pneg %p193
        %p636 = pneg %p190
        %p637 = pneg %p214
        %p638 = pneg %p211
        %p639 = pneg %p235
        %p640 = pneg %p232
        %p641 = pneg %p256
        %p642 = pneg %p253
        %p643 = pneg %p277
        %p644 = pneg %p274
        %p645 = pneg %p298
        %p646 = pneg %p295
        %p647 = pneg %p319
        %p648 = pneg %p316
        %p649 = pneg %p340
        %p650 = pneg %p337
        %p651 = pneg %p361
        %p652 = pneg %p358
        %p653 = pneg %p382
        %p654 = pneg %p379
        %p655 = pneg %p408
        %p656 = pneg %p405
        %s657 = smul.u32 2, %s38
        %p659 = scmp.eq.s32.totalorder %s39, 0
        // Predicated region
        $region125: #{tpu_custom_call.1} parent=83 // pred_check
          %p660 = pneg %p659
        $region126: #{tpu_custom_call.1} parent=83 // pred_check_branch
          %662 = sbr.rel (%p660) target = $region128
        $region127: #{tpu_custom_call.1} parent=83 // pred_region
          %v663 = vld [vmem:[#allocation3] sm:$0xff]
          %v664 = vld [vmem:[#allocation3 + $0x8] sm:$0xff]
          %v665 = vld [vmem:[#allocation6] sm:$0xff]
          %v666 = vadd.f32 %v663, %v665
          %v667 = vadd.f32 %v664, %v665
          %vm668 = vcmask 261120
          %669 = vst.msk [vmem:[#allocation2] sm:$0xff] %vm668, %v666
          %670 = vst.msk [vmem:[#allocation2 + $0x8] sm:$0xff] %vm668, %v667
        $region128: #{tpu_custom_call.1} parent=83 // pred_fallthru
          _
        %v671 = vld [vmem:[#allocation2] sm:$0xff]
        %v672 = vld [vmem:[#allocation2 + $0x8] sm:$0xff]
        %v673 = vpack.c.bf16 %v672, %v671
        %s674 = smul.u32 %s39, 4
        %s675 = smul.addr %s674, 4
        %s676 = scalar_lea.vmem %s2, %s675
        %v677 = vld [vmem:[%s676] sm:$0xf]
        %v678 = vld [vmem:[%s676 + $0x4] sm:$0xf]
        %v679 = vld [vmem:[%s676 + $0x8] sm:$0xf]
        %v680 = vld [vmem:[%s676 + $0xc] sm:$0xf]
        %s681 = scalar_lea.vmem [#allocation8], %s39
        %v682 = vld [vmem:[%s681] sm:$0x1]
        %v684 = vlaneseq
        %v685 = vshrl.u32 %v684, 7
        %v686 = vsub.s32 0, %v685
        %v687 = vrot.slane %v682, %v686
        %v693 = vunpack.c.l.b16 %v677
        %v694 = vunpack.c.l.b16 %v678
        %v695 = vunpack.c.l.b16 %v679
        %v696 = vunpack.c.l.b16 %v680
        %v697 = vpack.c.b16 %v694, %v693
        %v698 = vpack.c.b16 %v696, %v695
        %vm701 = vcmask 261120
        %v703 = vsel %vm701, %v673, 0
        %705 = vmatprep.subr.bf16.mxu0 0
        %706 = vmatpush1.bf16.msra.mxu0 %v697
        %707 = vmatprep.subr.bf16.mxu0 0
        %708 = vmatpush1.bf16.msra.mxu0 %v698
        %709 = vmatprep.subr.bf16.mxu0 0
        %710 = vmatpush1.bf16.msra.mxu0 0
        %711 = vmatprep.subr.bf16.mxu0 0
        %712 = vmatpush1.bf16.msra.mxu0 0
        %713 = vmatprep.subr.bf16.mxu0 0
        %714 = vmatpush1.bf16.msra.mxu0 0
        %715 = vmatprep.subr.bf16.mxu0 0
        %716 = vmatpush1.bf16.msra.mxu0 0
        %717 = vmatprep.subr.bf16.mxu0 0
        %718 = vmatpush1.bf16.msra.mxu0 0
        %719 = vmatprep.subr.bf16.mxu0 0
        %720 = vmatpush1.bf16.msra.mxu0 0
        %721 = vmatprep.subr.bf16.mxu0 0
        %722 = vmatpush1.bf16.msra.mxu0 0
        %723 = vmatprep.subr.bf16.mxu0 0
        %724 = vmatpush1.bf16.msra.mxu0 0
        %725 = vmatprep.subr.bf16.mxu0 0
        %726 = vmatpush1.bf16.msra.mxu0 0
        %727 = vmatprep.subr.bf16.mxu0 0
        %728 = vmatpush1.bf16.msra.mxu0 0
        %729 = vmatprep.subr.bf16.mxu0 0
        %730 = vmatpush1.bf16.msra.mxu0 0
        %731 = vmatprep.subr.bf16.mxu0 0
        %732 = vmatpush1.bf16.msra.mxu0 0
        %733 = vmatprep.subr.bf16.mxu0 0
        %734 = vmatpush1.bf16.msra.mxu0 0
        %735 = vmatprep.subr.bf16.mxu0 0
        %736 = vmatpush1.bf16.msra.mxu0 0
        %737 = vmatprep.mubr.bf16.mxu0 0
        %738 = vmatmul.mubr.bf16.gmra.mrb[0].mxu0 %v703
        %v739 = vpop.f32.mrb[0].mxu0
        %v740 = vadd.f32 %v687, %v739
        %v741 = vpop.f32.mrb[0].mxu0
        %v742 = vpop.f32.mrb[0].mxu0
        %v743 = vadd.f32 %v687, %v742
        %v744 = vpop.f32.mrb[0].mxu0
        %745 = vdwg.mxu0
        %748 = vrot.lane.b32.xlu0 %v740, 104
        %v749 = vpop.permute.xlu0 %748
        %750 = vrot.lane.b32.xlu0 %v743, 104
        %v751 = vpop.permute.xlu0 %750
        %754 = vrot.lane.b32.xlu0 %v740, 80
        %v755 = vpop.permute.xlu0 %754
        %756 = vrot.lane.b32.xlu0 %v743, 80
        %v757 = vpop.permute.xlu0 %756
        %760 = vrot.lane.b32.xlu0 %v740, 56
        %v761 = vpop.permute.xlu0 %760
        %762 = vrot.lane.b32.xlu0 %v743, 56
        %v763 = vpop.permute.xlu0 %762
        %v766 = vpack.c.bf16 %v740, %v740
        %v767 = vpack.c.bf16 %v743, %v743
        %v768 = vpack.c.bf16 %v749, %v749
        %v769 = vpack.c.bf16 %v751, %v751
        %v770 = vpack.c.bf16 %v755, %v755
        %v771 = vpack.c.bf16 %v757, %v757
        %v772 = vpack.c.bf16 %v761, %v761
        %v773 = vpack.c.bf16 %v763, %v763
        %775 = vrot.lane.b32.xlu0 %v766, 120
        %v776 = vpop.permute.xlu0 %775
        %vm777 = vcmask 64512
        %v779 = vsel %vm777, %v766, 0
        %v782 = vsel %vm777, %v776, 0
        %784 = vmatprep.subr.bf16.mxu0 0
        %785 = vmatpush1.bf16.xpose.msra.mxu0 %v782
        %786 = vmatprep.subr.bf16.mxu0 0
        %787 = vmatpush1.bf16.xpose.msra.mxu0 0
        %788 = vmatprep.subr.bf16.mxu0 0
        %789 = vmatpush1.bf16.xpose.msra.mxu0 0
        %790 = vmatprep.subr.bf16.mxu0 0
        %791 = vmatpush1.bf16.xpose.msra.mxu0 0
        %792 = vmatprep.subr.bf16.mxu0 0
        %793 = vmatpush1.bf16.xpose.msra.mxu0 0
        %794 = vmatprep.subr.bf16.mxu0 0
        %795 = vmatpush1.bf16.xpose.msra.mxu0 0
        %796 = vmatprep.subr.bf16.mxu0 0
        %797 = vmatpush1.bf16.xpose.msra.mxu0 0
        %798 = vmatprep.subr.bf16.mxu0 0
        %799 = vmatpush1.bf16.xpose.msra.mxu0 0
        %800 = vmatprep.subr.bf16.mxu0 0
        %801 = vmatpush1.bf16.xpose.msra.mxu0 0
        %802 = vmatprep.subr.bf16.mxu0 0
        %803 = vmatpush1.bf16.xpose.msra.mxu0 0
        %804 = vmatprep.subr.bf16.mxu0 0
        %805 = vmatpush1.bf16.xpose.msra.mxu0 0
        %806 = vmatprep.subr.bf16.mxu0 0
        %807 = vmatpush1.bf16.xpose.msra.mxu0 0
        %808 = vmatprep.subr.bf16.mxu0 0
        %809 = vmatpush1.bf16.xpose.msra.mxu0 0
        %810 = vmatprep.subr.bf16.mxu0 0
        %811 = vmatpush1.bf16.xpose.msra.mxu0 0
        %812 = vmatprep.subr.bf16.mxu0 0
        %813 = vmatpush1.bf16.xpose.msra.mxu0 0
        %814 = vmatprep.subr.bf16.mxu0 0
        %815 = vmatpush1.bf16.xpose.msra.mxu0 0
        %816 = vmatprep.mubr.bf16.mxu0 0
        %817 = vmatmul.mubr.bf16.gmra.mrb[0].mxu0 %v779
        %v818 = vpop.f32.mrb[0].mxu0
        %v819 = vadd.f32 0.0, %v818
        %v820 = vpop.f32.mrb[0].mxu0
        %v821 = vpop.f32.mrb[0].mxu0
        %v822 = vpop.f32.mrb[0].mxu0
        %823 = vdwg.mxu0
        %825 = vrot.lane.b32.xlu0 %v767, 120
        %v826 = vpop.permute.xlu0 %825
        %v828 = vsel %vm777, %v767, 0
        %v831 = vsel %vm777, %v826, 0
        %833 = vmatprep.subr.bf16.mxu0 0
        %834 = vmatpush1.bf16.xpose.msra.mxu0 %v831
        %835 = vmatprep.subr.bf16.mxu0 0
        %836 = vmatpush1.bf16.xpose.msra.mxu0 0
        %837 = vmatprep.subr.bf16.mxu0 0
        %838 = vmatpush1.bf16.xpose.msra.mxu0 0
        %839 = vmatprep.subr.bf16.mxu0 0
        %840 = vmatpush1.bf16.xpose.msra.mxu0 0
        %841 = vmatprep.subr.bf16.mxu0 0
        %842 = vmatpush1.bf16.xpose.msra.mxu0 0
        %843 = vmatprep.subr.bf16.mxu0 0
        %844 = vmatpush1.bf16.xpose.msra.mxu0 0
        %845 = vmatprep.subr.bf16.mxu0 0
        %846 = vmatpush1.bf16.xpose.msra.mxu0 0
        %847 = vmatprep.subr.bf16.mxu0 0
        %848 = vmatpush1.bf16.xpose.msra.mxu0 0
        %849 = vmatprep.subr.bf16.mxu0 0
        %850 = vmatpush1.bf16.xpose.msra.mxu0 0
        %851 = vmatprep.subr.bf16.mxu0 0
        %852 = vmatpush1.bf16.xpose.msra.mxu0 0
        %853 = vmatprep.subr.bf16.mxu0 0
        %854 = vmatpush1.bf16.xpose.msra.mxu0 0
        %855 = vmatprep.subr.bf16.mxu0 0
        %856 = vmatpush1.bf16.xpose.msra.mxu0 0
        %857 = vmatprep.subr.bf16.mxu0 0
        %858 = vmatpush1.bf16.xpose.msra.mxu0 0
        %859 = vmatprep.subr.bf16.mxu0 0
        %860 = vmatpush1.bf16.xpose.msra.mxu0 0
        %861 = vmatprep.subr.bf16.mxu0 0
        %862 = vmatpush1.bf16.xpose.msra.mxu0 0
        %863 = vmatprep.subr.bf16.mxu0 0
        %864 = vmatpush1.bf16.xpose.msra.mxu0 0
        %865 = vmatprep.mubr.bf16.mxu0 0
        %866 = vmatmul.mubr.bf16.gmra.mrb[0].mxu0 %v828
        %v867 = vpop.f32.mrb[0].mxu0
        %v868 = vadd.f32 0.0, %v867
        %v869 = vpop.f32.mrb[0].mxu0
        %v870 = vpop.f32.mrb[0].mxu0
        %v871 = vpop.f32.mrb[0].mxu0
        %872 = vdwg.mxu0
        %874 = vrot.lane.b32.xlu0 %v768, 120
        %v875 = vpop.permute.xlu0 %874
        %v877 = vsel %vm777, %v768, 0
        %v880 = vsel %vm777, %v875, 0
        %882 = vmatprep.subr.bf16.mxu0 0
        %883 = vmatpush1.bf16.xpose.msra.mxu0 %v880
        %884 = vmatprep.subr.bf16.mxu0 0
        %885 = vmatpush1.bf16.xpose.msra.mxu0 0
        %886 = vmatprep.subr.bf16.mxu0 0
        %887 = vmatpush1.bf16.xpose.msra.mxu0 0
        %888 = vmatprep.subr.bf16.mxu0 0
        %889 = vmatpush1.bf16.xpose.msra.mxu0 0
        %890 = vmatprep.subr.bf16.mxu0 0
        %891 = vmatpush1.bf16.xpose.msra.mxu0 0
        %892 = vmatprep.subr.bf16.mxu0 0
        %893 = vmatpush1.bf16.xpose.msra.mxu0 0
        %894 = vmatprep.subr.bf16.mxu0 0
        %895 = vmatpush1.bf16.xpose.msra.mxu0 0
        %896 = vmatprep.subr.bf16.mxu0 0
        %897 = vmatpush1.bf16.xpose.msra.mxu0 0
        %898 = vmatprep.subr.bf16.mxu0 0
        %899 = vmatpush1.bf16.xpose.msra.mxu0 0
        %900 = vmatprep.subr.bf16.mxu0 0
        %901 = vmatpush1.bf16.xpose.msra.mxu0 0
        %902 = vmatprep.subr.bf16.mxu0 0
        %903 = vmatpush1.bf16.xpose.msra.mxu0 0
        %904 = vmatprep.subr.bf16.mxu0 0
        %905 = vmatpush1.bf16.xpose.msra.mxu0 0
        %906 = vmatprep.subr.bf16.mxu0 0
        %907 = vmatpush1.bf16.xpose.msra.mxu0 0
        %908 = vmatprep.subr.bf16.mxu0 0
        %909 = vmatpush1.bf16.xpose.msra.mxu0 0
        %910 = vmatprep.subr.bf16.mxu0 0
        %911 = vmatpush1.bf16.xpose.msra.mxu0 0
        %912 = vmatprep.subr.bf16.mxu0 0
        %913 = vmatpush1.bf16.xpose.msra.mxu0 0
        %914 = vmatprep.mubr.bf16.mxu0 0
        %915 = vmatmul.mubr.bf16.gmra.mrb[0].mxu0 %v877
        %v916 = vpop.f32.mrb[0].mxu0
        %v917 = vadd.f32 0.0, %v916
        %v918 = vpop.f32.mrb[0].mxu0
        %v919 = vpop.f32.mrb[0].mxu0
        %v920 = vpop.f32.mrb[0].mxu0
        %921 = vdwg.mxu0
        %923 = vrot.lane.b32.xlu0 %v769, 120
        %v924 = vpop.permute.xlu0 %923
        %v926 = vsel %vm777, %v769, 0
        %v929 = vsel %vm777, %v924, 0
        %931 = vmatprep.subr.bf16.mxu0 0
        %932 = vmatpush1.bf16.xpose.msra.mxu0 %v929
        %933 = vmatprep.subr.bf16.mxu0 0
        %934 = vmatpush1.bf16.xpose.msra.mxu0 0
        %935 = vmatprep.subr.bf16.mxu0 0
        %936 = vmatpush1.bf16.xpose.msra.mxu0 0
        %937 = vmatprep.subr.bf16.mxu0 0
        %938 = vmatpush1.bf16.xpose.msra.mxu0 0
        %939 = vmatprep.subr.bf16.mxu0 0
        %940 = vmatpush1.bf16.xpose.msra.mxu0 0
        %941 = vmatprep.subr.bf16.mxu0 0
        %942 = vmatpush1.bf16.xpose.msra.mxu0 0
        %943 = vmatprep.subr.bf16.mxu0 0
        %944 = vmatpush1.bf16.xpose.msra.mxu0 0
        %945 = vmatprep.subr.bf16.mxu0 0
        %946 = vmatpush1.bf16.xpose.msra.mxu0 0
        %947 = vmatprep.subr.bf16.mxu0 0
        %948 = vmatpush1.bf16.xpose.msra.mxu0 0
        %949 = vmatprep.subr.bf16.mxu0 0
        %950 = vmatpush1.bf16.xpose.msra.mxu0 0
        %951 = vmatprep.subr.bf16.mxu0 0
        %952 = vmatpush1.bf16.xpose.msra.mxu0 0
        %953 = vmatprep.subr.bf16.mxu0 0
        %954 = vmatpush1.bf16.xpose.msra.mxu0 0
        %955 = vmatprep.subr.bf16.mxu0 0
        %956 = vmatpush1.bf16.xpose.msra.mxu0 0
        %957 = vmatprep.subr.bf16.mxu0 0
        %958 = vmatpush1.bf16.xpose.msra.mxu0 0
        %959 = vmatprep.subr.bf16.mxu0 0
        %960 = vmatpush1.bf16.xpose.msra.mxu0 0
        %961 = vmatprep.subr.bf16.mxu0 0
        %962 = vmatpush1.bf16.xpose.msra.mxu0 0
        %963 = vmatprep.mubr.bf16.mxu0 0
        %964 = vmatmul.mubr.bf16.gmra.mrb[0].mxu0 %v926
        %v965 = vpop.f32.mrb[0].mxu0
        %v966 = vadd.f32 0.0, %v965
        %v967 = vpop.f32.mrb[0].mxu0
        %v968 = vpop.f32.mrb[0].mxu0
        %v969 = vpop.f32.mrb[0].mxu0
        %970 = vdwg.mxu0
        %972 = vrot.lane.b32.xlu0 %v770, 120
        %v973 = vpop.permute.xlu0 %972
        %v975 = vsel %vm777, %v770, 0
        %v978 = vsel %vm777, %v973, 0
        %980 = vmatprep.subr.bf16.mxu0 0
        %981 = vmatpush1.bf16.xpose.msra.mxu0 %v978
        %982 = vmatprep.subr.bf16.mxu0 0
        %983 = vmatpush1.bf16.xpose.msra.mxu0 0
        %984 = vmatprep.subr.bf16.mxu0 0
        %985 = vmatpush1.bf16.xpose.msra.mxu0 0
        %986 = vmatprep.subr.bf16.mxu0 0
        %987 = vmatpush1.bf16.xpose.msra.mxu0 0
        %988 = vmatprep.subr.bf16.mxu0 0
        %989 = vmatpush1.bf16.xpose.msra.mxu0 0
        %990 = vmatprep.subr.bf16.mxu0 0
        %991 = vmatpush1.bf16.xpose.msra.mxu0 0
        %992 = vmatprep.subr.bf16.mxu0 0
        %993 = vmatpush1.bf16.xpose.msra.mxu0 0
        %994 = vmatprep.subr.bf16.mxu0 0
        %995 = vmatpush1.bf16.xpose.msra.mxu0 0
        %996 = vmatprep.subr.bf16.mxu0 0
        %997 = vmatpush1.bf16.xpose.msra.mxu0 0
        %998 = vmatprep.subr.bf16.mxu0 0
        %999 = vmatpush1.bf16.xpose.msra.mxu0 0
        %1000 = vmatprep.subr.bf16.mxu0 0
        %1001 = vmatpush1.bf16.xpose.msra.mxu0 0
        %1002 = vmatprep.subr.bf16.mxu0 0
        %1003 = vmatpush1.bf16.xpose.msra.mxu0 0
        %1004 = vmatprep.subr.bf16.mxu0 0
        %1005 = vmatpush1.bf16.xpose.msra.mxu0 0
        %1006 = vmatprep.subr.bf16.mxu0 0
        %1007 = vmatpush1.bf16.xpose.msra.mxu0 0
        %1008 = vmatprep.subr.bf16.mxu0 0
        %1009 = vmatpush1.bf16.xpose.msra.mxu0 0
        %1010 = vmatprep.subr.bf16.mxu0 0
        %1011 = vmatpush1.bf16.xpose.msra.mxu0 0
        %1012 = vmatprep.mubr.bf16.mxu0 0
        %1013 = vmatmul.mubr.bf16.gmra.mrb[0].mxu0 %v975
        %v1014 = vpop.f32.mrb[0].mxu0
        %v1015 = vadd.f32 0.0, %v1014
        %v1016 = vpop.f32.mrb[0].mxu0
        %v1017 = vpop.f32.mrb[0].mxu0
        %v1018 = vpop.f32.mrb[0].mxu0
        %1019 = vdwg.mxu0
        %1021 = vrot.lane.b32.xlu0 %v771, 120
        %v1022 = vpop.permute.xlu0 %1021
        %v1024 = vsel %vm777, %v771, 0
        %v1027 = vsel %vm777, %v1022, 0
        %1029 = vmatprep.subr.bf16.mxu0 0
        %1030 = vmatpush1.bf16.xpose.msra.mxu0 %v1027
        %1031 = vmatprep.subr.bf16.mxu0 0
        %1032 = vmatpush1.bf16.xpose.msra.mxu0 0
        %1033 = vmatprep.subr.bf16.mxu0 0
        %1034 = vmatpush1.bf16.xpose.msra.mxu0 0
        %1035 = vmatprep.subr.bf16.mxu0 0
        %1036 = vmatpush1.bf16.xpose.msra.mxu0 0
        %1037 = vmatprep.subr.bf16.mxu0 0
        %1038 = vmatpush1.bf16.xpose.msra.mxu0 0
        %1039 = vmatprep.subr.bf16.mxu0 0
        %1040 = vmatpush1.bf16.xpose.msra.mxu0 0
        %1041 = vmatprep.subr.bf16.mxu0 0
        %1042 = vmatpush1.bf16.xpose.msra.mxu0 0
        %1043 = vmatprep.subr.bf16.mxu0 0
        %1044 = vmatpush1.bf16.xpose.msra.mxu0 0
        %1045 = vmatprep.subr.bf16.mxu0 0
        %1046 = vmatpush1.bf16.xpose.msra.mxu0 0
        %1047 = vmatprep.subr.bf16.mxu0 0
        %1048 = vmatpush1.bf16.xpose.msra.mxu0 0
        %1049 = vmatprep.subr.bf16.mxu0 0
        %1050 = vmatpush1.bf16.xpose.msra.mxu0 0
        %1051 = vmatprep.subr.bf16.mxu0 0
        %1052 = vmatpush1.bf16.xpose.msra.mxu0 0
        %1053 = vmatprep.subr.bf16.mxu0 0
        %1054 = vmatpush1.bf16.xpose.msra.mxu0 0
        %1055 = vmatprep.subr.bf16.mxu0 0
        %1056 = vmatpush1.bf16.xpose.msra.mxu0 0
        %1057 = vmatprep.subr.bf16.mxu0 0
        %1058 = vmatpush1.bf16.xpose.msra.mxu0 0
        %1059 = vmatprep.subr.bf16.mxu0 0
        %1060 = vmatpush1.bf16.xpose.msra.mxu0 0
        %1061 = vmatprep.mubr.bf16.mxu0 0
        %1062 = vmatmul.mubr.bf16.gmra.mrb[0].mxu0 %v1024
        %v1063 = vpop.f32.mrb[0].mxu0
        %v1064 = vadd.f32 0.0, %v1063
        %v1065 = vpop.f32.mrb[0].mxu0
        %v1066 = vpop.f32.mrb[0].mxu0
        %v1067 = vpop.f32.mrb[0].mxu0
        %1068 = vdwg.mxu0
        %1070 = vrot.lane.b32.xlu0 %v772, 120
        %v1071 = vpop.permute.xlu0 %1070
        %v1073 = vsel %vm777, %v772, 0
        %v1076 = vsel %vm777, %v1071, 0
        %1078 = vmatprep.subr.bf16.mxu0 0
        %1079 = vmatpush1.bf16.xpose.msra.mxu0 %v1076
        %1080 = vmatprep.subr.bf16.mxu0 0
        %1081 = vmatpush1.bf16.xpose.msra.mxu0 0
        %1082 = vmatprep.subr.bf16.mxu0 0
        %1083 = vmatpush1.bf16.xpose.msra.mxu0 0
        %1084 = vmatprep.subr.bf16.mxu0 0
        %1085 = vmatpush1.bf16.xpose.msra.mxu0 0
        %1086 = vmatprep.subr.bf16.mxu0 0
        %1087 = vmatpush1.bf16.xpose.msra.mxu0 0
        %1088 = vmatprep.subr.bf16.mxu0 0
        %1089 = vmatpush1.bf16.xpose.msra.mxu0 0
        %1090 = vmatprep.subr.bf16.mxu0 0
        %1091 = vmatpush1.bf16.xpose.msra.mxu0 0
        %1092 = vmatprep.subr.bf16.mxu0 0
        %1093 = vmatpush1.bf16.xpose.msra.mxu0 0
        %1094 = vmatprep.subr.bf16.mxu0 0
        %1095 = vmatpush1.bf16.xpose.msra.mxu0 0
        %1096 = vmatprep.subr.bf16.mxu0 0
        %1097 = vmatpush1.bf16.xpose.msra.mxu0 0
        %1098 = vmatprep.subr.bf16.mxu0 0
        %1099 = vmatpush1.bf16.xpose.msra.mxu0 0
        %1100 = vmatprep.subr.bf16.mxu0 0
        %1101 = vmatpush1.bf16.xpose.msra.mxu0 0
        %1102 = vmatprep.subr.bf16.mxu0 0
        %1103 = vmatpush1.bf16.xpose.msra.mxu0 0
        %1104 = vmatprep.subr.bf16.mxu0 0
        %1105 = vmatpush1.bf16.xpose.msra.mxu0 0
        %1106 = vmatprep.subr.bf16.mxu0 0
        %1107 = vmatpush1.bf16.xpose.msra.mxu0 0
        %1108 = vmatprep.subr.bf16.mxu0 0
        %1109 = vmatpush1.bf16.xpose.msra.mxu0 0
        %1110 = vmatprep.mubr.bf16.mxu0 0
        %1111 = vmatmul.mubr.bf16.gmra.mrb[0].mxu0 %v1073
        %v1112 = vpop.f32.mrb[0].mxu0
        %v1113 = vadd.f32 0.0, %v1112
        %v1114 = vpop.f32.mrb[0].mxu0
        %v1115 = vpop.f32.mrb[0].mxu0
        %v1116 = vpop.f32.mrb[0].mxu0
        %1117 = vdwg.mxu0
        %1119 = vrot.lane.b32.xlu0 %v773, 120
        %v1120 = vpop.permute.xlu0 %1119
        %v1122 = vsel %vm777, %v773, 0
        %v1125 = vsel %vm777, %v1120, 0
        %1127 = vmatprep.subr.bf16.mxu0 0
        %1128 = vmatpush1.bf16.xpose.msra.mxu0 %v1125
        %1129 = vmatprep.subr.bf16.mxu0 0
        %1130 = vmatpush1.bf16.xpose.msra.mxu0 0
        %1131 = vmatprep.subr.bf16.mxu0 0
        %1132 = vmatpush1.bf16.xpose.msra.mxu0 0
        %1133 = vmatprep.subr.bf16.mxu0 0
        %1134 = vmatpush1.bf16.xpose.msra.mxu0 0
        %1135 = vmatprep.subr.bf16.mxu0 0
        %1136 = vmatpush1.bf16.xpose.msra.mxu0 0
        %1137 = vmatprep.subr.bf16.mxu0 0
        %1138 = vmatpush1.bf16.xpose.msra.mxu0 0
        %1139 = vmatprep.subr.bf16.mxu0 0
        %1140 = vmatpush1.bf16.xpose.msra.mxu0 0
        %1141 = vmatprep.subr.bf16.mxu0 0
        %1142 = vmatpush1.bf16.xpose.msra.mxu0 0
        %1143 = vmatprep.subr.bf16.mxu0 0
        %1144 = vmatpush1.bf16.xpose.msra.mxu0 0
        %1145 = vmatprep.subr.bf16.mxu0 0
        %1146 = vmatpush1.bf16.xpose.msra.mxu0 0
        %1147 = vmatprep.subr.bf16.mxu0 0
        %1148 = vmatpush1.bf16.xpose.msra.mxu0 0
        %1149 = vmatprep.subr.bf16.mxu0 0
        %1150 = vmatpush1.bf16.xpose.msra.mxu0 0
        %1151 = vmatprep.subr.bf16.mxu0 0
        %1152 = vmatpush1.bf16.xpose.msra.mxu0 0
        %1153 = vmatprep.subr.bf16.mxu0 0
        %1154 = vmatpush1.bf16.xpose.msra.mxu0 0
        %1155 = vmatprep.subr.bf16.mxu0 0
        %1156 = vmatpush1.bf16.xpose.msra.mxu0 0
        %1157 = vmatprep.subr.bf16.mxu0 0
        %1158 = vmatpush1.bf16.xpose.msra.mxu0 0
        %1159 = vmatprep.mubr.bf16.mxu0 0
        %1160 = vmatmul.mubr.bf16.gmra.mrb[0].mxu0 %v1122
        %v1161 = vpop.f32.mrb[0].mxu0
        %v1162 = vadd.f32 0.0, %v1161
        %v1163 = vpop.f32.mrb[0].mxu0
        %v1164 = vpop.f32.mrb[0].mxu0
        %v1165 = vpop.f32.mrb[0].mxu0
        %1166 = vdwg.mxu0
        %v1167 = vsel %vm777, %v819, -inf
        %1168 = vmax.xlane.f32.xlu0 %v1167
        %v1169 = vpop.xlane.xlu0 %1168
        %v1170 = vsel %vm777, %v868, -inf
        %1171 = vmax.xlane.f32.xlu0 %v1170
        %v1172 = vpop.xlane.xlu0 %1171
        %v1173 = vsel %vm777, %v917, -inf
        %1174 = vmax.xlane.f32.xlu0 %v1173
        %v1175 = vpop.xlane.xlu0 %1174
        %v1176 = vsel %vm777, %v966, -inf
        %1177 = vmax.xlane.f32.xlu0 %v1176
        %v1178 = vpop.xlane.xlu0 %1177
        %v1179 = vsel %vm777, %v1015, -inf
        %1180 = vmax.xlane.f32.xlu0 %v1179
        %v1181 = vpop.xlane.xlu0 %1180
        %v1182 = vsel %vm777, %v1064, -inf
        %1183 = vmax.xlane.f32.xlu0 %v1182
        %v1184 = vpop.xlane.xlu0 %1183
        %v1185 = vsel %vm777, %v1113, -inf
        %1186 = vmax.xlane.f32.xlu0 %v1185
        %v1187 = vpop.xlane.xlu0 %1186
        %v1188 = vsel %vm777, %v1162, -inf
        %1189 = vmax.xlane.f32.xlu0 %v1188
        %v1190 = vpop.xlane.xlu0 %1189
        %v1191 = vsub.f32 %v819, %v1169
        %v1192 = vsub.f32 %v868, %v1172
        %v1193 = vsub.f32 %v917, %v1175
        %v1194 = vsub.f32 %v966, %v1178
        %v1195 = vsub.f32 %v1015, %v1181
        %v1196 = vsub.f32 %v1064, %v1184
        %v1197 = vsub.f32 %v1113, %v1187
        %v1198 = vsub.f32 %v1162, %v1190
        %v1199 = vmul.f32 %v1191, 1.442695
        %v1200 = vpow.pop %v1199
        %v1201 = vmul.f32 %v1192, 1.442695
        %v1202 = vpow.pop %v1201
        %v1203 = vmul.f32 %v1193, 1.442695
        %v1204 = vpow.pop %v1203
        %v1205 = vmul.f32 %v1194, 1.442695
        %v1206 = vpow.pop %v1205
        %v1207 = vmul.f32 %v1195, 1.442695
        %v1208 = vpow.pop %v1207
        %v1209 = vmul.f32 %v1196, 1.442695
        %v1210 = vpow.pop %v1209
        %v1211 = vmul.f32 %v1197, 1.442695
        %v1212 = vpow.pop %v1211
        %v1213 = vmul.f32 %v1198, 1.442695
        %v1214 = vpow.pop %v1213
        %v1215 = vsel %vm777, %v1200, 0.0
        %1216 = vadd.xlane.f32.xlu0 %v1215
        %v1217 = vpop.xlane.xlu0 %1216
        %v1218 = vsel %vm777, %v1202, 0.0
        %1219 = vadd.xlane.f32.xlu0 %v1218
        %v1220 = vpop.xlane.xlu0 %1219
        %v1221 = vsel %vm777, %v1204, 0.0
        %1222 = vadd.xlane.f32.xlu0 %v1221
        %v1223 = vpop.xlane.xlu0 %1222
        %v1224 = vsel %vm777, %v1206, 0.0
        %1225 = vadd.xlane.f32.xlu0 %v1224
        %v1226 = vpop.xlane.xlu0 %1225
        %v1227 = vsel %vm777, %v1208, 0.0
        %1228 = vadd.xlane.f32.xlu0 %v1227
        %v1229 = vpop.xlane.xlu0 %1228
        %v1230 = vsel %vm777, %v1210, 0.0
        %1231 = vadd.xlane.f32.xlu0 %v1230
        %v1232 = vpop.xlane.xlu0 %1231
        %v1233 = vsel %vm777, %v1212, 0.0
        %1234 = vadd.xlane.f32.xlu0 %v1233
        %v1235 = vpop.xlane.xlu0 %1234
        %v1236 = vsel %vm777, %v1214, 0.0
        %1237 = vadd.xlane.f32.xlu0 %v1236
        %v1238 = vpop.xlane.xlu0 %1237
        %v1239 = vrcp.pop %v1217
        %v1240 = vrcp.pop %v1220
        %v1241 = vrcp.pop %v1223
        %v1242 = vrcp.pop %v1226
        %v1243 = vrcp.pop %v1229
        %v1244 = vrcp.pop %v1232
        %v1245 = vrcp.pop %v1235
        %v1246 = vrcp.pop %v1238
        %v1247 = vmul.f32 %v1200, %v1239
        %v1248 = vmul.f32 %v1202, %v1240
        %v1249 = vmul.f32 %v1204, %v1241
        %v1250 = vmul.f32 %v1206, %v1242
        %v1251 = vmul.f32 %v1208, %v1243
        %v1252 = vmul.f32 %v1210, %v1244
        %v1253 = vmul.f32 %v1212, %v1245
        %v1254 = vmul.f32 %v1214, %v1246
        %v1255 = vpack.c.bf16 %v1247, %v1247
        %v1256 = vpack.c.bf16 %v1248, %v1248
        %v1257 = vpack.c.bf16 %v1249, %v1249
        %v1258 = vpack.c.bf16 %v1250, %v1250
        %v1259 = vpack.c.bf16 %v1251, %v1251
        %v1260 = vpack.c.bf16 %v1252, %v1252
        %v1261 = vpack.c.bf16 %v1253, %v1253
        %v1262 = vpack.c.bf16 %v1254, %v1254
        %1263 = vrot.lane.b32.xlu0 %v766, 112
        %v1264 = vpop.permute.xlu0 %1263
        %v1266 = vsel %vm777, %v1255, 0
        %vm1268 = vcmask 1043456
        %v1270 = vsel %vm1268, %v1264, 0
        %1272 = vmatprep.subr.bf16.mxu0 0
        %1273 = vmatpush1.bf16.msra.mxu0 %v1270
        %1274 = vmatprep.subr.bf16.mxu0 0
        %1275 = vmatpush1.bf16.msra.mxu0 0
        %1276 = vmatprep.subr.bf16.mxu0 0
        %1277 = vmatpush1.bf16.msra.mxu0 0
        %1278 = vmatprep.subr.bf16.mxu0 0
        %1279 = vmatpush1.bf16.msra.mxu0 0
        %1280 = vmatprep.subr.bf16.mxu0 0
        %1281 = vmatpush1.bf16.msra.mxu0 0
        %1282 = vmatprep.subr.bf16.mxu0 0
        %1283 = vmatpush1.bf16.msra.mxu0 0
        %1284 = vmatprep.subr.bf16.mxu0 0
        %1285 = vmatpush1.bf16.msra.mxu0 0
        %1286 = vmatprep.subr.bf16.mxu0 0
        %1287 = vmatpush1.bf16.msra.mxu0 0
        %1288 = vmatprep.subr.bf16.mxu0 0
        %1289 = vmatpush1.bf16.msra.mxu0 0
        %1290 = vmatprep.subr.bf16.mxu0 0
        %1291 = vmatpush1.bf16.msra.mxu0 0
        %1292 = vmatprep.subr.bf16.mxu0 0
        %1293 = vmatpush1.bf16.msra.mxu0 0
        %1294 = vmatprep.subr.bf16.mxu0 0
        %1295 = vmatpush1.bf16.msra.mxu0 0
        %1296 = vmatprep.subr.bf16.mxu0 0
        %1297 = vmatpush1.bf16.msra.mxu0 0
        %1298 = vmatprep.subr.bf16.mxu0 0
        %1299 = vmatpush1.bf16.msra.mxu0 0
        %1300 = vmatprep.subr.bf16.mxu0 0
        %1301 = vmatpush1.bf16.msra.mxu0 0
        %1302 = vmatprep.subr.bf16.mxu0 0
        %1303 = vmatpush1.bf16.msra.mxu0 0
        %1304 = vmatprep.mubr.bf16.mxu0 0
        %1305 = vmatmul.mubr.bf16.gmra.mrb[0].mxu0 %v1266
        %v1306 = vpop.f32.mrb[0].mxu0
        %v1307 = vadd.f32 0.0, %v1306
        %v1308 = vpop.f32.mrb[0].mxu0
        %v1309 = vpop.f32.mrb[0].mxu0
        %v1310 = vpop.f32.mrb[0].mxu0
        %1311 = vdwg.mxu0
        %1312 = vrot.lane.b32.xlu0 %v767, 112
        %v1313 = vpop.permute.xlu0 %1312
        %v1315 = vsel %vm777, %v1256, 0
        %v1318 = vsel %vm1268, %v1313, 0
        %1320 = vmatprep.subr.bf16.mxu0 0
        %1321 = vmatpush1.bf16.msra.mxu0 %v1318
        %1322 = vmatprep.subr.bf16.mxu0 0
        %1323 = vmatpush1.bf16.msra.mxu0 0
        %1324 = vmatprep.subr.bf16.mxu0 0
        %1325 = vmatpush1.bf16.msra.mxu0 0
        %1326 = vmatprep.subr.bf16.mxu0 0
        %1327 = vmatpush1.bf16.msra.mxu0 0
        %1328 = vmatprep.subr.bf16.mxu0 0
        %1329 = vmatpush1.bf16.msra.mxu0 0
        %1330 = vmatprep.subr.bf16.mxu0 0
        %1331 = vmatpush1.bf16.msra.mxu0 0
        %1332 = vmatprep.subr.bf16.mxu0 0
        %1333 = vmatpush1.bf16.msra.mxu0 0
        %1334 = vmatprep.subr.bf16.mxu0 0
        %1335 = vmatpush1.bf16.msra.mxu0 0
        %1336 = vmatprep.subr.bf16.mxu0 0
        %1337 = vmatpush1.bf16.msra.mxu0 0
        %1338 = vmatprep.subr.bf16.mxu0 0
        %1339 = vmatpush1.bf16.msra.mxu0 0
        %1340 = vmatprep.subr.bf16.mxu0 0
        %1341 = vmatpush1.bf16.msra.mxu0 0
        %1342 = vmatprep.subr.bf16.mxu0 0
        %1343 = vmatpush1.bf16.msra.mxu0 0
        %1344 = vmatprep.subr.bf16.mxu0 0
        %1345 = vmatpush1.bf16.msra.mxu0 0
        %1346 = vmatprep.subr.bf16.mxu0 0
        %1347 = vmatpush1.bf16.msra.mxu0 0
        %1348 = vmatprep.subr.bf16.mxu0 0
        %1349 = vmatpush1.bf16.msra.mxu0 0
        %1350 = vmatprep.subr.bf16.mxu0 0
        %1351 = vmatpush1.bf16.msra.mxu0 0
        %1352 = vmatprep.mubr.bf16.mxu0 0
        %1353 = vmatmul.mubr.bf16.gmra.mrb[0].mxu0 %v1315
        %v1354 = vpop.f32.mrb[0].mxu0
        %v1355 = vadd.f32 0.0, %v1354
        %v1356 = vpop.f32.mrb[0].mxu0
        %v1357 = vpop.f32.mrb[0].mxu0
        %v1358 = vpop.f32.mrb[0].mxu0
        %1359 = vdwg.mxu0
        %1360 = vrot.lane.b32.xlu0 %v768, 112
        %v1361 = vpop.permute.xlu0 %1360
        %v1363 = vsel %vm777, %v1257, 0
        %v1366 = vsel %vm1268, %v1361, 0
        %1368 = vmatprep.subr.bf16.mxu0 0
        %1369 = vmatpush1.bf16.msra.mxu0 %v1366
        %1370 = vmatprep.subr.bf16.mxu0 0
        %1371 = vmatpush1.bf16.msra.mxu0 0
        %1372 = vmatprep.subr.bf16.mxu0 0
        %1373 = vmatpush1.bf16.msra.mxu0 0
        %1374 = vmatprep.subr.bf16.mxu0 0
        %1375 = vmatpush1.bf16.msra.mxu0 0
        %1376 = vmatprep.subr.bf16.mxu0 0
        %1377 = vmatpush1.bf16.msra.mxu0 0
        %1378 = vmatprep.subr.bf16.mxu0 0
        %1379 = vmatpush1.bf16.msra.mxu0 0
        %1380 = vmatprep.subr.bf16.mxu0 0
        %1381 = vmatpush1.bf16.msra.mxu0 0
        %1382 = vmatprep.subr.bf16.mxu0 0
        %1383 = vmatpush1.bf16.msra.mxu0 0
        %1384 = vmatprep.subr.bf16.mxu0 0
        %1385 = vmatpush1.bf16.msra.mxu0 0
        %1386 = vmatprep.subr.bf16.mxu0 0
        %1387 = vmatpush1.bf16.msra.mxu0 0
        %1388 = vmatprep.subr.bf16.mxu0 0
        %1389 = vmatpush1.bf16.msra.mxu0 0
        %1390 = vmatprep.subr.bf16.mxu0 0
        %1391 = vmatpush1.bf16.msra.mxu0 0
        %1392 = vmatprep.subr.bf16.mxu0 0
        %1393 = vmatpush1.bf16.msra.mxu0 0
        %1394 = vmatprep.subr.bf16.mxu0 0
        %1395 = vmatpush1.bf16.msra.mxu0 0
        %1396 = vmatprep.subr.bf16.mxu0 0
        %1397 = vmatpush1.bf16.msra.mxu0 0
        %1398 = vmatprep.subr.bf16.mxu0 0
        %1399 = vmatpush1.bf16.msra.mxu0 0
        %1400 = vmatprep.mubr.bf16.mxu0 0
        %1401 = vmatmul.mubr.bf16.gmra.mrb[0].mxu0 %v1363
        %v1402 = vpop.f32.mrb[0].mxu0
        %v1403 = vadd.f32 0.0, %v1402
        %v1404 = vpop.f32.mrb[0].mxu0
        %v1405 = vpop.f32.mrb[0].mxu0
        %v1406 = vpop.f32.mrb[0].mxu0
        %1407 = vdwg.mxu0
        %1408 = vrot.lane.b32.xlu0 %v769, 112
        %v1409 = vpop.permute.xlu0 %1408
        %v1411 = vsel %vm777, %v1258, 0
        %v1414 = vsel %vm1268, %v1409, 0
        %1416 = vmatprep.subr.bf16.mxu0 0
        %1417 = vmatpush1.bf16.msra.mxu0 %v1414
        %1418 = vmatprep.subr.bf16.mxu0 0
        %1419 = vmatpush1.bf16.msra.mxu0 0
        %1420 = vmatprep.subr.bf16.mxu0 0
        %1421 = vmatpush1.bf16.msra.mxu0 0
        %1422 = vmatprep.subr.bf16.mxu0 0
        %1423 = vmatpush1.bf16.msra.mxu0 0
        %1424 = vmatprep.subr.bf16.mxu0 0
        %1425 = vmatpush1.bf16.msra.mxu0 0
        %1426 = vmatprep.subr.bf16.mxu0 0
        %1427 = vmatpush1.bf16.msra.mxu0 0
        %1428 = vmatprep.subr.bf16.mxu0 0
        %1429 = vmatpush1.bf16.msra.mxu0 0
        %1430 = vmatprep.subr.bf16.mxu0 0
        %1431 = vmatpush1.bf16.msra.mxu0 0
        %1432 = vmatprep.subr.bf16.mxu0 0
        %1433 = vmatpush1.bf16.msra.mxu0 0
        %1434 = vmatprep.subr.bf16.mxu0 0
        %1435 = vmatpush1.bf16.msra.mxu0 0
        %1436 = vmatprep.subr.bf16.mxu0 0
        %1437 = vmatpush1.bf16.msra.mxu0 0
        %1438 = vmatprep.subr.bf16.mxu0 0
        %1439 = vmatpush1.bf16.msra.mxu0 0
        %1440 = vmatprep.subr.bf16.mxu0 0
        %1441 = vmatpush1.bf16.msra.mxu0 0
        %1442 = vmatprep.subr.bf16.mxu0 0
        %1443 = vmatpush1.bf16.msra.mxu0 0
        %1444 = vmatprep.subr.bf16.mxu0 0
        %1445 = vmatpush1.bf16.msra.mxu0 0
        %1446 = vmatprep.subr.bf16.mxu0 0
        %1447 = vmatpush1.bf16.msra.mxu0 0
        %1448 = vmatprep.mubr.bf16.mxu0 0
        %1449 = vmatmul.mubr.bf16.gmra.mrb[0].mxu0 %v1411
        %v1450 = vpop.f32.mrb[0].mxu0
        %v1451 = vadd.f32 0.0, %v1450
        %v1452 = vpop.f32.mrb[0].mxu0
        %v1453 = vpop.f32.mrb[0].mxu0
        %v1454 = vpop.f32.mrb[0].mxu0
        %1455 = vdwg.mxu0
        %1456 = vrot.lane.b32.xlu0 %v770, 112
        %v1457 = vpop.permute.xlu0 %1456
        %v1459 = vsel %vm777, %v1259, 0
        %v1462 = vsel %vm1268, %v1457, 0
        %1464 = vmatprep.subr.bf16.mxu0 0
        %1465 = vmatpush1.bf16.msra.mxu0 %v1462
        %1466 = vmatprep.subr.bf16.mxu0 0
        %1467 = vmatpush1.bf16.msra.mxu0 0
        %1468 = vmatprep.subr.bf16.mxu0 0
        %1469 = vmatpush1.bf16.msra.mxu0 0
        %1470 = vmatprep.subr.bf16.mxu0 0
        %1471 = vmatpush1.bf16.msra.mxu0 0
        %1472 = vmatprep.subr.bf16.mxu0 0
        %1473 = vmatpush1.bf16.msra.mxu0 0
        %1474 = vmatprep.subr.bf16.mxu0 0
        %1475 = vmatpush1.bf16.msra.mxu0 0
        %1476 = vmatprep.subr.bf16.mxu0 0
        %1477 = vmatpush1.bf16.msra.mxu0 0
        %1478 = vmatprep.subr.bf16.mxu0 0
        %1479 = vmatpush1.bf16.msra.mxu0 0
        %1480 = vmatprep.subr.bf16.mxu0 0
        %1481 = vmatpush1.bf16.msra.mxu0 0
        %1482 = vmatprep.subr.bf16.mxu0 0
        %1483 = vmatpush1.bf16.msra.mxu0 0
        %1484 = vmatprep.subr.bf16.mxu0 0
        %1485 = vmatpush1.bf16.msra.mxu0 0
        %1486 = vmatprep.subr.bf16.mxu0 0
        %1487 = vmatpush1.bf16.msra.mxu0 0
        %1488 = vmatprep.subr.bf16.mxu0 0
        %1489 = vmatpush1.bf16.msra.mxu0 0
        %1490 = vmatprep.subr.bf16.mxu0 0
        %1491 = vmatpush1.bf16.msra.mxu0 0
        %1492 = vmatprep.subr.bf16.mxu0 0
        %1493 = vmatpush1.bf16.msra.mxu0 0
        %1494 = vmatprep.subr.bf16.mxu0 0
        %1495 = vmatpush1.bf16.msra.mxu0 0
        %1496 = vmatprep.mubr.bf16.mxu0 0
        %1497 = vmatmul.mubr.bf16.gmra.mrb[0].mxu0 %v1459
        %v1498 = vpop.f32.mrb[0].mxu0
        %v1499 = vadd.f32 0.0, %v1498
        %v1500 = vpop.f32.mrb[0].mxu0
        %v1501 = vpop.f32.mrb[0].mxu0
        %v1502 = vpop.f32.mrb[0].mxu0
        %1503 = vdwg.mxu0
        %1504 = vrot.lane.b32.xlu0 %v771, 112
        %v1505 = vpop.permute.xlu0 %1504
        %v1507 = vsel %vm777, %v1260, 0
        %v1510 = vsel %vm1268, %v1505, 0
        %1512 = vmatprep.subr.bf16.mxu0 0
        %1513 = vmatpush1.bf16.msra.mxu0 %v1510
        %1514 = vmatprep.subr.bf16.mxu0 0
        %1515 = vmatpush1.bf16.msra.mxu0 0
        %1516 = vmatprep.subr.bf16.mxu0 0
        %1517 = vmatpush1.bf16.msra.mxu0 0
        %1518 = vmatprep.subr.bf16.mxu0 0
        %1519 = vmatpush1.bf16.msra.mxu0 0
        %1520 = vmatprep.subr.bf16.mxu0 0
        %1521 = vmatpush1.bf16.msra.mxu0 0
        %1522 = vmatprep.subr.bf16.mxu0 0
        %1523 = vmatpush1.bf16.msra.mxu0 0
        %1524 = vmatprep.subr.bf16.mxu0 0
        %1525 = vmatpush1.bf16.msra.mxu0 0
        %1526 = vmatprep.subr.bf16.mxu0 0
        %1527 = vmatpush1.bf16.msra.mxu0 0
        %1528 = vmatprep.subr.bf16.mxu0 0
        %1529 = vmatpush1.bf16.msra.mxu0 0
        %1530 = vmatprep.subr.bf16.mxu0 0
        %1531 = vmatpush1.bf16.msra.mxu0 0
        %1532 = vmatprep.subr.bf16.mxu0 0
        %1533 = vmatpush1.bf16.msra.mxu0 0
        %1534 = vmatprep.subr.bf16.mxu0 0
        %1535 = vmatpush1.bf16.msra.mxu0 0
        %1536 = vmatprep.subr.bf16.mxu0 0
        %1537 = vmatpush1.bf16.msra.mxu0 0
        %1538 = vmatprep.subr.bf16.mxu0 0
        %1539 = vmatpush1.bf16.msra.mxu0 0
        %1540 = vmatprep.subr.bf16.mxu0 0
        %1541 = vmatpush1.bf16.msra.mxu0 0
        %1542 = vmatprep.subr.bf16.mxu0 0
        %1543 = vmatpush1.bf16.msra.mxu0 0
        %1544 = vmatprep.mubr.bf16.mxu0 0
        %1545 = vmatmul.mubr.bf16.gmra.mrb[0].mxu0 %v1507
        %v1546 = vpop.f32.mrb[0].mxu0
        %v1547 = vadd.f32 0.0, %v1546
        %v1548 = vpop.f32.mrb[0].mxu0
        %v1549 = vpop.f32.mrb[0].mxu0
        %v1550 = vpop.f32.mrb[0].mxu0
        %1551 = vdwg.mxu0
        %1552 = vrot.lane.b32.xlu0 %v772, 112
        %v1553 = vpop.permute.xlu0 %1552
        %v1555 = vsel %vm777, %v1261, 0
        %v1558 = vsel %vm1268, %v1553, 0
        %1560 = vmatprep.subr.bf16.mxu0 0
        %1561 = vmatpush1.bf16.msra.mxu0 %v1558
        %1562 = vmatprep.subr.bf16.mxu0 0
        %1563 = vmatpush1.bf16.msra.mxu0 0
        %1564 = vmatprep.subr.bf16.mxu0 0
        %1565 = vmatpush1.bf16.msra.mxu0 0
        %1566 = vmatprep.subr.bf16.mxu0 0
        %1567 = vmatpush1.bf16.msra.mxu0 0
        %1568 = vmatprep.subr.bf16.mxu0 0
        %1569 = vmatpush1.bf16.msra.mxu0 0
        %1570 = vmatprep.subr.bf16.mxu0 0
        %1571 = vmatpush1.bf16.msra.mxu0 0
        %1572 = vmatprep.subr.bf16.mxu0 0
        %1573 = vmatpush1.bf16.msra.mxu0 0
        %1574 = vmatprep.subr.bf16.mxu0 0
        %1575 = vmatpush1.bf16.msra.mxu0 0
        %1576 = vmatprep.subr.bf16.mxu0 0
        %1577 = vmatpush1.bf16.msra.mxu0 0
        %1578 = vmatprep.subr.bf16.mxu0 0
        %1579 = vmatpush1.bf16.msra.mxu0 0
        %1580 = vmatprep.subr.bf16.mxu0 0
        %1581 = vmatpush1.bf16.msra.mxu0 0
        %1582 = vmatprep.subr.bf16.mxu0 0
        %1583 = vmatpush1.bf16.msra.mxu0 0
        %1584 = vmatprep.subr.bf16.mxu0 0
        %1585 = vmatpush1.bf16.msra.mxu0 0
        %1586 = vmatprep.subr.bf16.mxu0 0
        %1587 = vmatpush1.bf16.msra.mxu0 0
        %1588 = vmatprep.subr.bf16.mxu0 0
        %1589 = vmatpush1.bf16.msra.mxu0 0
        %1590 = vmatprep.subr.bf16.mxu0 0
        %1591 = vmatpush1.bf16.msra.mxu0 0
        %1592 = vmatprep.mubr.bf16.mxu0 0
        %1593 = vmatmul.mubr.bf16.gmra.mrb[0].mxu0 %v1555
        %v1594 = vpop.f32.mrb[0].mxu0
        %v1595 = vadd.f32 0.0, %v1594
        %v1596 = vpop.f32.mrb[0].mxu0
        %v1597 = vpop.f32.mrb[0].mxu0
        %v1598 = vpop.f32.mrb[0].mxu0
        %1599 = vdwg.mxu0
        %1600 = vrot.lane.b32.xlu0 %v773, 112
        %v1601 = vpop.permute.xlu0 %1600
        %v1603 = vsel %vm777, %v1262, 0
        %v1606 = vsel %vm1268, %v1601, 0
        %1608 = vmatprep.subr.bf16.mxu0 0
        %1609 = vmatpush1.bf16.msra.mxu0 %v1606
        %1610 = vmatprep.subr.bf16.mxu0 0
        %1611 = vmatpush1.bf16.msra.mxu0 0
        %1612 = vmatprep.subr.bf16.mxu0 0
        %1613 = vmatpush1.bf16.msra.mxu0 0
        %1614 = vmatprep.subr.bf16.mxu0 0
        %1615 = vmatpush1.bf16.msra.mxu0 0
        %1616 = vmatprep.subr.bf16.mxu0 0
        %1617 = vmatpush1.bf16.msra.mxu0 0
        %1618 = vmatprep.subr.bf16.mxu0 0
        %1619 = vmatpush1.bf16.msra.mxu0 0
        %1620 = vmatprep.subr.bf16.mxu0 0
        %1621 = vmatpush1.bf16.msra.mxu0 0
        %1622 = vmatprep.subr.bf16.mxu0 0
        %1623 = vmatpush1.bf16.msra.mxu0 0
        %1624 = vmatprep.subr.bf16.mxu0 0
        %1625 = vmatpush1.bf16.msra.mxu0 0
        %1626 = vmatprep.subr.bf16.mxu0 0
        %1627 = vmatpush1.bf16.msra.mxu0 0
        %1628 = vmatprep.subr.bf16.mxu0 0
        %1629 = vmatpush1.bf16.msra.mxu0 0
        %1630 = vmatprep.subr.bf16.mxu0 0
        %1631 = vmatpush1.bf16.msra.mxu0 0
        %1632 = vmatprep.subr.bf16.mxu0 0
        %1633 = vmatpush1.bf16.msra.mxu0 0
        %1634 = vmatprep.subr.bf16.mxu0 0
        %1635 = vmatpush1.bf16.msra.mxu0 0
        %1636 = vmatprep.subr.bf16.mxu0 0
        %1637 = vmatpush1.bf16.msra.mxu0 0
        %1638 = vmatprep.subr.bf16.mxu0 0
        %1639 = vmatpush1.bf16.msra.mxu0 0
        %1640 = vmatprep.mubr.bf16.mxu0 0
        %1641 = vmatmul.mubr.bf16.gmra.mrb[0].mxu0 %v1603
        %v1642 = vpop.f32.mrb[0].mxu0
        %v1643 = vadd.f32 0.0, %v1642
        %v1644 = vpop.f32.mrb[0].mxu0
        %v1645 = vpop.f32.mrb[0].mxu0
        %v1646 = vpop.f32.mrb[0].mxu0
        %1647 = vdwg.mxu0
        %1650 = vrot.lane.b32.xlu0 %v1403, 8
        %v1651 = vpop.permute.xlu0 %1650
        %1652 = vrot.lane.b32.xlu0 %v1451, 8
        %v1653 = vpop.permute.xlu0 %1652
        %1658 = vrot.lane.b32.xlu0 %v1499, 16
        %v1659 = vpop.permute.xlu0 %1658
        %1660 = vrot.lane.b32.xlu0 %v1547, 16
        %v1661 = vpop.permute.xlu0 %1660
        %1666 = vrot.lane.b32.xlu0 %v1595, 24
        %v1667 = vpop.permute.xlu0 %1666
        %1668 = vrot.lane.b32.xlu0 %v1643, 24
        %v1669 = vpop.permute.xlu0 %1668
        %v1672 = vsel %vm777, %v1307, %v1651
        %v1673 = vsel %vm777, %v1355, %v1653
        %vm1674 = vcmask 130048
        %v1675 = vsel %vm1674, %v1672, %v1659
        %v1676 = vsel %vm1674, %v1673, %v1661
        %vm1677 = vcmask 195584
        %v1678 = vsel %vm1677, %v1675, %v1667
        %v1679 = vsel %vm1677, %v1676, %v1669
        %v1680 = vpack.c.bf16 %v1679, %v1678
        %s1681 = smul.addr %s674, 4
        %s1682 = scalar_lea.vmem %s4, %s1681
        %v1683 = vld [vmem:[%s1682] sm:$0xf]
        %v1684 = vld [vmem:[%s1682 + $0x4] sm:$0xf]
        %v1685 = vld [vmem:[%s1682 + $0x8] sm:$0xf]
        %v1686 = vld [vmem:[%s1682 + $0xc] sm:$0xf]
        %s1687 = scalar_lea.vmem [#allocation9], %s39
        %v1688 = vld [vmem:[%s1687] sm:$0x1]
        %v1690 = vlaneseq
        %v1691 = vshrl.u32 %v1690, 7
        %v1692 = vsub.s32 0, %v1691
        %v1693 = vrot.slane %v1688, %v1692
        %v1699 = vunpack.c.l.b16 %v1683
        %v1700 = vunpack.c.l.b16 %v1684
        %v1701 = vunpack.c.l.b16 %v1685
        %v1702 = vunpack.c.l.b16 %v1686
        %v1703 = vpack.c.b16 %v1700, %v1699
        %v1704 = vpack.c.b16 %v1702, %v1701
        %v1708 = vsel %vm701, %v1680, 0
        %1710 = vmatprep.subr.bf16.mxu0 0
        %1711 = vmatpush1.bf16.msra.mxu0 %v1703
        %1712 = vmatprep.subr.bf16.mxu0 0
        %1713 = vmatpush1.bf16.msra.mxu0 %v1704
        %1714 = vmatprep.subr.bf16.mxu0 0
        %1715 = vmatpush1.bf16.msra.mxu0 0
        %1716 = vmatprep.subr.bf16.mxu0 0
        %1717 = vmatpush1.bf16.msra.mxu0 0
        %1718 = vmatprep.subr.bf16.mxu0 0
        %1719 = vmatpush1.bf16.msra.mxu0 0
        %1720 = vmatprep.subr.bf16.mxu0 0
        %1721 = vmatpush1.bf16.msra.mxu0 0
        %1722 = vmatprep.subr.bf16.mxu0 0
        %1723 = vmatpush1.bf16.msra.mxu0 0
        %1724 = vmatprep.subr.bf16.mxu0 0
        %1725 = vmatpush1.bf16.msra.mxu0 0
        %1726 = vmatprep.subr.bf16.mxu0 0
        %1727 = vmatpush1.bf16.msra.mxu0 0
        %1728 = vmatprep.subr.bf16.mxu0 0
        %1729 = vmatpush1.bf16.msra.mxu0 0
        %1730 = vmatprep.subr.bf16.mxu0 0
        %1731 = vmatpush1.bf16.msra.mxu0 0
        %1732 = vmatprep.subr.bf16.mxu0 0
        %1733 = vmatpush1.bf16.msra.mxu0 0
        %1734 = vmatprep.subr.bf16.mxu0 0
        %1735 = vmatpush1.bf16.msra.mxu0 0
        %1736 = vmatprep.subr.bf16.mxu0 0
        %1737 = vmatpush1.bf16.msra.mxu0 0
        %1738 = vmatprep.subr.bf16.mxu0 0
        %1739 = vmatpush1.bf16.msra.mxu0 0
        %1740 = vmatprep.subr.bf16.mxu0 0
        %1741 = vmatpush1.bf16.msra.mxu0 0
        %1742 = vmatprep.mubr.bf16.mxu0 0
        %1743 = vmatmul.mubr.bf16.gmra.mrb[0].mxu0 %v1708
        %v1744 = vpop.f32.mrb[0].mxu0
        %v1745 = vadd.f32 %v1693, %v1744
        %v1746 = vpop.f32.mrb[0].mxu0
        %v1747 = vpop.f32.mrb[0].mxu0
        %v1748 = vadd.f32 %v1693, %v1747
        %v1749 = vpop.f32.mrb[0].mxu0
        %1750 = vdwg.mxu0
        %v1751 = vadd.f32 %v671, %v1745
        %v1752 = vadd.f32 %v672, %v1748
        %v1753 = vsel %vm701, %v1751, 0.0
        %1754 = vadd.xlane.f32.xlu0 %v1753
        %v1755 = vpop.xlane.xlu0 %1754
        %v1756 = vsel %vm701, %v1752, 0.0
        %1757 = vadd.xlane.f32.xlu0 %v1756
        %v1758 = vpop.xlane.xlu0 %1757
        %v1759 = vrcp.pop 32.0
        %v1760 = vmul.f32 %v1755, %v1759
        %v1761 = vmul.f32 %v1758, %v1759
        %v1762 = vsub.f32 %v1751, %v1760
        %v1763 = vsub.f32 %v1752, %v1761
        %v1764 = vmul.f32 %v1762, %v1762
        %v1765 = vmul.f32 %v1763, %v1763
        %v1766 = vsel %vm701, %v1764, 0.0
        %1767 = vadd.xlane.f32.xlu0 %v1766
        %v1768 = vpop.xlane.xlu0 %1767
        %v1769 = vsel %vm701, %v1765, 0.0
        %1770 = vadd.xlane.f32.xlu0 %v1769
        %v1771 = vpop.xlane.xlu0 %1770
        %v1772 = vmul.f32 %v1768, %v1759
        %v1773 = vmul.f32 %v1771, %v1759
        %v1774 = vadd.f32 %v1772, 1e-05
        %v1775 = vadd.f32 %v1773, 1e-05
        %v1776 = vrsqrt.pop %v1774
        %v1777 = vrsqrt.pop %v1775
        %v1778 = vmul.f32 %v1762, %v1776
        %v1779 = vmul.f32 %v1763, %v1777
        %s1780 = scalar_lea.vmem [#allocation11], %s39
        %v1781 = vld [vmem:[%s1780] sm:$0x1]
        %v1783 = vlaneseq
        %v1784 = vshrl.u32 %v1783, 7
        %v1785 = vsub.s32 0, %v1784
        %v1786 = vrot.slane %v1781, %v1785
        %v1788 = vmul.f32 %v1778, %v1786
        %v1789 = vmul.f32 %v1779, %v1786
        %s1790 = scalar_lea.vmem [#allocation12], %s39
        %v1791 = vld [vmem:[%s1790] sm:$0x1]
        %v1793 = vlaneseq
        %v1794 = vshrl.u32 %v1793, 7
        %v1795 = vsub.s32 0, %v1794
        %v1796 = vrot.slane %v1791, %v1795
        %v1798 = vadd.f32 %v1788, %v1796
        %v1799 = vadd.f32 %v1789, %v1796
        %v1800 = vpack.c.bf16 %v1799, %v1798
        %s1801 = smul.addr %s674, 4
        %s1802 = scalar_lea.vmem %s8, %s1801
        %v1803 = vld [vmem:[%s1802] sm:$0xf]
        %v1804 = vld [vmem:[%s1802 + $0x4] sm:$0xf]
        %v1805 = vld [vmem:[%s1802 + $0x8] sm:$0xf]
        %v1806 = vld [vmem:[%s1802 + $0xc] sm:$0xf]
        %s1807 = scalar_lea.vmem [#allocation14], %s39
        %v1808 = vld [vmem:[%s1807] sm:$0x1]
        %v1810 = vlaneseq
        %v1811 = vshrl.u32 %v1810, 7
        %v1812 = vsub.s32 0, %v1811
        %v1813 = vrot.slane %v1808, %v1812
        %v1819 = vunpack.c.l.b16 %v1803
        %v1820 = vunpack.c.l.b16 %v1804
        %v1821 = vunpack.c.l.b16 %v1805
        %v1822 = vunpack.c.l.b16 %v1806
        %v1823 = vpack.c.b16 %v1820, %v1819
        %v1824 = vpack.c.b16 %v1822, %v1821
        %v1828 = vsel %vm701, %v1800, 0
        %1830 = vmatprep.subr.bf16.mxu0 0
        %1831 = vmatpush1.bf16.msra.mxu0 %v1823
        %1832 = vmatprep.subr.bf16.mxu0 0
        %1833 = vmatpush1.bf16.msra.mxu0 %v1824
        %1834 = vmatprep.subr.bf16.mxu0 0
        %1835 = vmatpush1.bf16.msra.mxu0 0
        %1836 = vmatprep.subr.bf16.mxu0 0
        %1837 = vmatpush1.bf16.msra.mxu0 0
        %1838 = vmatprep.subr.bf16.mxu0 0
        %1839 = vmatpush1.bf16.msra.mxu0 0
        %1840 = vmatprep.subr.bf16.mxu0 0
        %1841 = vmatpush1.bf16.msra.mxu0 0
        %1842 = vmatprep.subr.bf16.mxu0 0
        %1843 = vmatpush1.bf16.msra.mxu0 0
        %1844 = vmatprep.subr.bf16.mxu0 0
        %1845 = vmatpush1.bf16.msra.mxu0 0
        %1846 = vmatprep.subr.bf16.mxu0 0
        %1847 = vmatpush1.bf16.msra.mxu0 0
        %1848 = vmatprep.subr.bf16.mxu0 0
        %1849 = vmatpush1.bf16.msra.mxu0 0
        %1850 = vmatprep.subr.bf16.mxu0 0
        %1851 = vmatpush1.bf16.msra.mxu0 0
        %1852 = vmatprep.subr.bf16.mxu0 0
        %1853 = vmatpush1.bf16.msra.mxu0 0
        %1854 = vmatprep.subr.bf16.mxu0 0
        %1855 = vmatpush1.bf16.msra.mxu0 0
        %1856 = vmatprep.subr.bf16.mxu0 0
        %1857 = vmatpush1.bf16.msra.mxu0 0
        %1858 = vmatprep.subr.bf16.mxu0 0
        %1859 = vmatpush1.bf16.msra.mxu0 0
        %1860 = vmatprep.subr.bf16.mxu0 0
        %1861 = vmatpush1.bf16.msra.mxu0 0
        %1862 = vmatprep.mubr.bf16.mxu0 0
        %1863 = vmatmul.mubr.bf16.gmra.mrb[0].mxu0 %v1828
        %v1864 = vpop.f32.mrb[0].mxu0
        %v1865 = vadd.f32 %v1813, %v1864
        %v1866 = vpop.f32.mrb[0].mxu0
        %v1867 = vpop.f32.mrb[0].mxu0
        %v1868 = vadd.f32 %v1813, %v1867
        %v1869 = vpop.f32.mrb[0].mxu0
        %1870 = vdwg.mxu0
        %v1871 = vmax.f32 %v1865, 0.0
        %v1872 = vmax.f32 %v1868, 0.0
        %v1873 = vpack.c.bf16 %v1872, %v1871
        %s1874 = smul.u32 %s39, 8
        %s1875 = smul.addr %s1874, 4
        %s1876 = scalar_lea.vmem %s10, %s1875
        %v1877 = vld [vmem:[%s1876] sm:$0xf]
        %v1878 = vld [vmem:[%s1876 + $0x4] sm:$0xf]
        %v1879 = vld [vmem:[%s1876 + $0x8] sm:$0xf]
        %v1880 = vld [vmem:[%s1876 + $0xc] sm:$0xf]
        %v1881 = vld [vmem:[%s1876 + $0x10] sm:$0xf]
        %v1882 = vld [vmem:[%s1876 + $0x14] sm:$0xf]
        %v1883 = vld [vmem:[%s1876 + $0x18] sm:$0xf]
        %v1884 = vld [vmem:[%s1876 + $0x1c] sm:$0xf]
        %s1885 = scalar_lea.vmem [#allocation15], %s39
        %v1886 = vld [vmem:[%s1885] sm:$0x1]
        %v1888 = vlaneseq
        %v1889 = vshrl.u32 %v1888, 7
        %v1890 = vsub.s32 0, %v1889
        %v1891 = vrot.slane %v1886, %v1890
        %v1901 = vunpack.c.l.b16 %v1877
        %v1902 = vunpack.c.l.b16 %v1878
        %v1903 = vunpack.c.l.b16 %v1879
        %v1904 = vunpack.c.l.b16 %v1880
        %v1905 = vunpack.c.l.b16 %v1881
        %v1906 = vunpack.c.l.b16 %v1882
        %v1907 = vunpack.c.l.b16 %v1883
        %v1908 = vunpack.c.l.b16 %v1884
        %v1909 = vpack.c.b16 %v1902, %v1901
        %v1910 = vpack.c.b16 %v1904, %v1903
        %v1911 = vpack.c.b16 %v1906, %v1905
        %v1912 = vpack.c.b16 %v1908, %v1907
        %vm1917 = vcmask 523264
        %v1919 = vsel %vm1917, %v1873, 0
        %1921 = vmatprep.subr.bf16.mxu0 0
        %1922 = vmatpush1.bf16.msra.mxu0 %v1909
        %1923 = vmatprep.subr.bf16.mxu0 0
        %1924 = vmatpush1.bf16.msra.mxu0 %v1910
        %1925 = vmatprep.subr.bf16.mxu0 0
        %1926 = vmatpush1.bf16.msra.mxu0 %v1911
        %1927 = vmatprep.subr.bf16.mxu0 0
        %1928 = vmatpush1.bf16.msra.mxu0 %v1912
        %1929 = vmatprep.subr.bf16.mxu0 0
        %1930 = vmatpush1.bf16.msra.mxu0 0
        %1931 = vmatprep.subr.bf16.mxu0 0
        %1932 = vmatpush1.bf16.msra.mxu0 0
        %1933 = vmatprep.subr.bf16.mxu0 0
        %1934 = vmatpush1.bf16.msra.mxu0 0
        %1935 = vmatprep.subr.bf16.mxu0 0
        %1936 = vmatpush1.bf16.msra.mxu0 0
        %1937 = vmatprep.subr.bf16.mxu0 0
        %1938 = vmatpush1.bf16.msra.mxu0 0
        %1939 = vmatprep.subr.bf16.mxu0 0
        %1940 = vmatpush1.bf16.msra.mxu0 0
        %1941 = vmatprep.subr.bf16.mxu0 0
        %1942 = vmatpush1.bf16.msra.mxu0 0
        %1943 = vmatprep.subr.bf16.mxu0 0
        %1944 = vmatpush1.bf16.msra.mxu0 0
        %1945 = vmatprep.subr.bf16.mxu0 0
        %1946 = vmatpush1.bf16.msra.mxu0 0
        %1947 = vmatprep.subr.bf16.mxu0 0
        %1948 = vmatpush1.bf16.msra.mxu0 0
        %1949 = vmatprep.subr.bf16.mxu0 0
        %1950 = vmatpush1.bf16.msra.mxu0 0
        %1951 = vmatprep.subr.bf16.mxu0 0
        %1952 = vmatpush1.bf16.msra.mxu0 0
        %1953 = vmatprep.mubr.bf16.mxu0 0
        %1954 = vmatmul.mubr.bf16.gmra.mrb[0].mxu0 %v1919
        %v1955 = vpop.f32.mrb[0].mxu0
        %v1956 = vadd.f32 %v1891, %v1955
        %v1957 = vpop.f32.mrb[0].mxu0
        %v1958 = vpop.f32.mrb[0].mxu0
        %v1959 = vadd.f32 %v1891, %v1958
        %v1960 = vpop.f32.mrb[0].mxu0
        %1961 = vdwg.mxu0
        %v1962 = vadd.f32 %v1798, %v1956
        %v1963 = vadd.f32 %v1799, %v1959
        %v1964 = vsel %vm701, %v1962, 0.0
        %1965 = vadd.xlane.f32.xlu0 %v1964
        %v1966 = vpop.xlane.xlu0 %1965
        %v1967 = vsel %vm701, %v1963, 0.0
        %1968 = vadd.xlane.f32.xlu0 %v1967
        %v1969 = vpop.xlane.xlu0 %1968
        %v1970 = vmul.f32 %v1966, %v1759
        %v1971 = vmul.f32 %v1969, %v1759
        %v1972 = vsub.f32 %v1962, %v1970
        %v1973 = vsub.f32 %v1963, %v1971
        %v1974 = vmul.f32 %v1972, %v1972
        %v1975 = vmul.f32 %v1973, %v1973
        %v1976 = vsel %vm701, %v1974, 0.0
        %1977 = vadd.xlane.f32.xlu0 %v1976
        %v1978 = vpop.xlane.xlu0 %1977
        %v1979 = vsel %vm701, %v1975, 0.0
        %1980 = vadd.xlane.f32.xlu0 %v1979
        %v1981 = vpop.xlane.xlu0 %1980
        %v1982 = vmul.f32 %v1978, %v1759
        %v1983 = vmul.f32 %v1981, %v1759
        %v1984 = vadd.f32 %v1982, 1e-05
        %v1985 = vadd.f32 %v1983, 1e-05
        %v1986 = vrsqrt.pop %v1984
        %v1987 = vrsqrt.pop %v1985
        %v1988 = vmul.f32 %v1972, %v1986
        %v1989 = vmul.f32 %v1973, %v1987
        %s1990 = scalar_lea.vmem [#allocation17], %s39
        %v1991 = vld [vmem:[%s1990] sm:$0x1]
        %v1993 = vlaneseq
        %v1994 = vshrl.u32 %v1993, 7
        %v1995 = vsub.s32 0, %v1994
        %v1996 = vrot.slane %v1991, %v1995
        %v1998 = vmul.f32 %v1988, %v1996
        %v1999 = vmul.f32 %v1989, %v1996
        %s2000 = scalar_lea.vmem [#allocation18], %s39
        %v2001 = vld [vmem:[%s2000] sm:$0x1]
        %v2003 = vlaneseq
        %v2004 = vshrl.u32 %v2003, 7
        %v2005 = vsub.s32 0, %v2004
        %v2006 = vrot.slane %v2001, %v2005
        %v2008 = vadd.f32 %v1998, %v2006
        %v2009 = vadd.f32 %v1999, %v2006
        %2010 = vst.msk [vmem:[#allocation2] sm:$0xff] %vm701, %v2008
        %2011 = vst.msk [vmem:[#allocation2 + $0x8] sm:$0xff] %vm701, %v2009
        %p2012 = scmp.eq.s32.totalorder %s39, 1
        // Predicated region
        $region129: #{tpu_custom_call.1} parent=83 // pred_check
          %p2013 = pneg %p2012
        $region130: #{tpu_custom_call.1} parent=83 // pred_check_branch
          %2015 = sbr.rel (%p2013) target = $region132
        $region131: #{tpu_custom_call.1} parent=83 // pred_region
          %v2016 = vsel %vm701, %v2008, 0.0
          %v2017 = vrot.slane %v2016, 4
          %v2018 = vadd.f32 %v2016, %v2017
          %v2019 = vrot.slane %v2018, 2
          %v2020 = vadd.f32 %v2018, %v2019
          %v2021 = vrot.slane %v2020, 1
          %v2022 = vadd.f32 %v2020, %v2021
          %v2023 = vsel %vm701, %v2009, 0.0
          %v2024 = vrot.slane %v2023, 4
          %v2025 = vadd.f32 %v2023, %v2024
          %v2026 = vrot.slane %v2025, 2
          %v2027 = vadd.f32 %v2025, %v2026
          %v2028 = vrot.slane %v2027, 1
          %v2029 = vadd.f32 %v2027, %v2028
          %v2030 = vrcp.pop 8.0
          %v2031 = vmul.f32 %v2022, %v2030
          %v2032 = vmul.f32 %v2029, %v2030
          %v2033 = vpack.c.bf16 %v2031, %v2031
          %v2034 = vpack.c.bf16 %v2032, %v2032
          %v2035 = vld [vmem:[%s14] sm:$0xf]
          %v2036 = vld [vmem:[%s14 + $0x4] sm:$0xf]
          %v2037 = vld [vmem:[%s14 + $0x8] sm:$0xf]
          %v2038 = vld [vmem:[%s14 + $0xc] sm:$0xf]
          %v2039 = vld [vmem:[%s15] sm:$0x1]
          %v2041 = vlaneseq
          %v2042 = vshrl.u32 %v2041, 7
          %v2043 = vsub.s32 0, %v2042
          %v2044 = vrot.slane %v2039, %v2043
          %v2048 = vunpack.c.l.b16 %v2033
          %v2049 = vunpack.c.l.b16 %v2034
          %vm2050 = vcmask 1041409
          %v2051 = vsel %vm2050, %v2049, %v2048
          %v2052 = vpack.c.b16 %v2051, %v2051
          %v2057 = vunpack.c.l.b16 %v2035
          %v2058 = vunpack.c.l.b16 %v2036
          %v2059 = vunpack.c.l.b16 %v2037
          %v2060 = vunpack.c.l.b16 %v2038
          %v2061 = vpack.c.b16 %v2058, %v2057
          %v2062 = vpack.c.b16 %v2060, %v2059
          %v2066 = vsel %vm701, %v2052, 0
          %2068 = vmatprep.subr.bf16.mxu0 0
          %2069 = vmatpush1.bf16.msra.mxu0 %v2061
          %2070 = vmatprep.subr.bf16.mxu0 0
          %2071 = vmatpush1.bf16.msra.mxu0 %v2062
          %2072 = vmatprep.subr.bf16.mxu0 0
          %2073 = vmatpush1.bf16.msra.mxu0 0
          %2074 = vmatprep.subr.bf16.mxu0 0
          %2075 = vmatpush1.bf16.msra.mxu0 0
          %2076 = vmatprep.subr.bf16.mxu0 0
          %2077 = vmatpush1.bf16.msra.mxu0 0
          %2078 = vmatprep.subr.bf16.mxu0 0
          %2079 = vmatpush1.bf16.msra.mxu0 0
          %2080 = vmatprep.subr.bf16.mxu0 0
          %2081 = vmatpush1.bf16.msra.mxu0 0
          %2082 = vmatprep.subr.bf16.mxu0 0
          %2083 = vmatpush1.bf16.msra.mxu0 0
          %2084 = vmatprep.subr.bf16.mxu0 0
          %2085 = vmatpush1.bf16.msra.mxu0 0
          %2086 = vmatprep.subr.bf16.mxu0 0
          %2087 = vmatpush1.bf16.msra.mxu0 0
          %2088 = vmatprep.subr.bf16.mxu0 0
          %2089 = vmatpush1.bf16.msra.mxu0 0
          %2090 = vmatprep.subr.bf16.mxu0 0
          %2091 = vmatpush1.bf16.msra.mxu0 0
          %2092 = vmatprep.subr.bf16.mxu0 0
          %2093 = vmatpush1.bf16.msra.mxu0 0
          %2094 = vmatprep.subr.bf16.mxu0 0
          %2095 = vmatpush1.bf16.msra.mxu0 0
          %2096 = vmatprep.subr.bf16.mxu0 0
          %2097 = vmatpush1.bf16.msra.mxu0 0
          %2098 = vmatprep.subr.bf16.mxu0 0
          %2099 = vmatpush1.bf16.msra.mxu0 0
          %2100 = vmatprep.mubr.bf16.mxu0 0
          %2101 = vmatmul.mubr.bf16.gmra.mrb[0].mxu0 %v2066
          %v2102 = vpop.f32.mrb[0].mxu0
          %v2103 = vadd.f32 %v2044, %v2102
          %v2104 = vpop.f32.mrb[0].mxu0
          %v2105 = vpop.f32.mrb[0].mxu0
          %v2106 = vpop.f32.mrb[0].mxu0
          %2107 = vdwg.mxu0
          %v2108 = vxor.u32 %v2103, 2147483648
          %v2109 = vmul.f32 %v2108, 1.442695
          %v2110 = vpow.pop %v2109
          %v2111 = vadd.f32 %v2110, 1.0
          %v2112 = vrcp.pop %v2111
          %v2113 = vmul.f32 1.0, %v2112
          %2114 = vst [vmem:[#allocation20] sm:$0x3] %v2113
        $region132: #{tpu_custom_call.1} parent=83 // pred_fallthru
          _
        // Predicated region
        $region133: #{tpu_custom_call.1} parent=83 // pred_check
          %p2115 = pneg %p405
        $region134: #{tpu_custom_call.1} parent=83 // pred_check_branch
          %2117 = sbr.rel (%p2115) target = $region136
        $region135: #{tpu_custom_call.1} parent=83 // pred_region
          %s2119 = ssub.s32 32, 32
          %2120 = vsyncadd [#allocation5], %s2119
          %s2121 = smul.addr %s38, 32
          %s2122 = scalar_lea.hbm %s16, %s2121
          %s2124 = sshll.u32 [#allocation20], 4
          %s2125 = int_to_ptr.vmem [resolvable:$true] %s2124
          %2127 = dma.vmem_to_hbm [thread:$0]  %s2125, 32, %s2122, [#allocation5]
        $region136: #{tpu_custom_call.1} parent=83 // pred_fallthru
          _
        // Predicated region
        $region137: #{tpu_custom_call.1} parent=83 // pred_check
          %p2128 = pneg %p405
        $region138: #{tpu_custom_call.1} parent=83 // pred_check_branch
          %2130 = sbr.rel (%p2128) target = $region140
        $region139: #{tpu_custom_call.1} parent=83 // pred_region
          %2131 = dma.done [#allocation5], 32
        $region140: #{tpu_custom_call.1} parent=83 // pred_fallthru
          _
      $region84: #{tpu_custom_call.1} parent=5 // pred_fallthru
        _
      %p2132 = scmp.le.s32.totalorder 2, %s29
      // Predicated region
      $region141: #{tpu_custom_call.1} parent=5 // pred_check
        %p2133 = pneg %p2132
      $region142: #{tpu_custom_call.1} parent=5 // pred_check_branch
        %2135 = sbr.rel (%p2133) target = $region144
      $region143: #{tpu_custom_call.1} parent=5 // pred_region
        %s2136 = ssub.s32 %s29, 2
      $region144: #{tpu_custom_call.1} parent=5 // pred_fallthru
        _
    $region6: #{tpu_custom_call.1} parent=1 // loop_footer
      %s33 = sadd.s32 1, %s29
    $region7: #{tpu_custom_call.1} parent=1 // loop_footer_branch
      %28 = sbr.rel target = $region3
    $region8: #{tpu_custom_call.1} parent=1 // loop_exit
      _
    %2137 = vsyncpa [#allocation4], 1
    %s2138 = scalar_lea.sflag [#allocation4], 1
    %2139 = vsyncpa %s2138, 1
    %2140 = vsyncpa [#allocation7], 1
    %2141 = vsyncpa [#allocation10], 1
    %2142 = vsyncpa [#allocation13], 1
    %2143 = vsyncpa [#allocation16], 1
    %2144 = vsyncpa [#allocation19], 1
    %2145 = vsyncpa [#allocation5], 1
    %s2146 = scalar_lea.sflag [#allocation5], 1
    %2147 = vsyncpa %s2146, 1

</llo_original>
